<compile_context>
chip_gen: v5e
topology: v5e:2x2
jax: 0.10.0
libtpu: 0.0.40
codegen_flags: <defaults>
</compile_context>

<pallas_src>
import numpy as np
import jax
import jax.numpy as jnp
from jax.experimental import pallas as pl
from jax.experimental.pallas import tpu as pltpu

# Fixed Sobel taps (PyTorch Conv* is cross-correlation: no kernel flip).
_SOBEL_Y = np.array([[1., 2., 1.], [0., 0., 0.], [-1., -2., -1.]], np.float32)
_SOBEL_X = _SOBEL_Y.T
_SOBEL_SUM = _SOBEL_X + _SOBEL_Y          # linearity: conv_x + conv_y == conv(Sx+Sy)


def _sobel_matrix(h, w):
    """(H*W, H*W) matrix K so that edge_flat = x_flat @ K implements the
    depthwise 3x3 Sobel-sum conv with zero padding 1 (boundaries folded in)."""
    n = h * w
    k = np.zeros((n, n), np.float32)
    for r in range(h):
        for c in range(w):
            dst = r * w + c
            for di in range(3):
                for dj in range(3):
                    tap = _SOBEL_SUM[di, dj]
                    if tap == 0.0:
                        continue
                    rr, cc = r + di - 1, c + dj - 1
                    if 0 <= rr < h and 0 <= cc < w:
                        k[rr * w + cc, dst] += tap
    return k


def _pool_selectors(hl, wl):
    """Four (hl*wl, ho*wo) 0/1 matrices; selector (er, ec) picks element
    (2r+er, 2k+ec) of the input for pooled output (r, k).  Elementwise max of
    the four matmul results == MaxPool2d(2, 2)."""
    ho, wo = hl // 2, wl // 2
    sels = []
    for er in (0, 1):
        for ec in (0, 1):
            s = np.zeros((hl * wl, ho * wo), np.float32)
            for r in range(ho):
                for k in range(wo):
                    s[(2 * r + er) * wl + (2 * k + ec), r * wo + k] = 1.0
            sels.append(s)
    return sels


def _make_prefp_kernel(num_scales):
    def kernel(*refs):
        x_ref, k_ref = refs[0], refs[1]
        pos = 2
        sel_refs, w_refs = [], []
        for _ in range(num_scales):
            sel_refs.append(refs[pos:pos + 4]); pos += 4
            w_refs.append(refs[pos]); pos += 1
        out_refs = refs[pos:pos + num_scales]

        # ---- Stage 1: depthwise 3x3 Sobel (pad=1) as one folded matmul. ------
        xf = x_ref[0]                                        # (C, H*W) lane-dense
        feat = jnp.dot(xf, k_ref[...], preferred_element_type=jnp.float32)

        # ---- Stage 2+3: pool pyramid + 1x1 projection + exact SiLU. ----------
        for s in range(num_scales):
            # 2x2/s2 max pool: 4 corner-selection matmuls (batched over C on the
            # otherwise-idle MXU) + elementwise max on the VPU.
            c00 = jnp.dot(feat, sel_refs[s][0][...], preferred_element_type=jnp.float32)
            c01 = jnp.dot(feat, sel_refs[s][1][...], preferred_element_type=jnp.float32)
            c10 = jnp.dot(feat, sel_refs[s][2][...], preferred_element_type=jnp.float32)
            c11 = jnp.dot(feat, sel_refs[s][3][...], preferred_element_type=jnp.float32)
            feat = jnp.maximum(jnp.maximum(c00, c01), jnp.maximum(c10, c11))

            # 1x1 projection: (OC, C) @ (C, HO*WO) -> (OC, HO*WO), single matmul.
            y = jnp.dot(w_refs[s][...], feat, preferred_element_type=jnp.float32)
            # Exact SiLU: exp goes to the EUP, divide is exact (no approx recip).
            silu = y * (1.0 / (1.0 + jnp.exp(-y)))
            out_refs[s][0] = silu                            # one store per scale

    return kernel


def prefp_forward(x, proj_weights):
    """x: (N, C, H, W) f32; proj_weights: list of (OC_i, C) 1x1-conv weights.
    Returns [silu(proj_i(maxpool^(i+1)(sobel(x)))) for each projection]."""
    n, c, h, w = x.shape
    num_scales = len(proj_weights)
    out_chs = [int(wt.shape[0]) for wt in proj_weights]
    for wt in proj_weights:
        assert int(wt.shape[1]) == c, wt.shape
    assert h % (1 << num_scales) == 0 and w % (1 << num_scales) == 0

    xf = x.reshape(n, c, h * w)                              # free NCHW reshape
    k_mat = jnp.asarray(_sobel_matrix(h, w))

    operands = [xf, k_mat]
    in_specs = [
        pl.BlockSpec((1, c, h * w), lambda i: (i, 0, 0)),
        pl.BlockSpec((h * w, h * w), lambda i: (0, 0)),
    ]
    out_shape, out_specs, out_hw = [], [], []
    hl, wl = h, w
    for oc, wt in zip(out_chs, proj_weights):
        ho, wo = hl // 2, wl // 2
        for sel in _pool_selectors(hl, wl):
            operands.append(jnp.asarray(sel))
            in_specs.append(pl.BlockSpec((hl * wl, ho * wo), lambda i: (0, 0)))
        operands.append(wt)
        in_specs.append(pl.BlockSpec((oc, c), lambda i: (0, 0)))
        out_shape.append(jax.ShapeDtypeStruct((n, oc, ho * wo), jnp.float32))
        out_specs.append(pl.BlockSpec((1, oc, ho * wo), lambda i: (i, 0, 0)))
        out_hw.append((ho, wo))
        hl, wl = ho, wo

    outs = pl.pallas_call(
        _make_prefp_kernel(num_scales),
        grid=(n,),
        out_shape=tuple(out_shape),
        in_specs=in_specs,
        out_specs=tuple(out_specs),
        compiler_params=pltpu.CompilerParams(
            dimension_semantics=("parallel",)),       # shards batch across TCs on v7x
    )(*operands)

    # Spatially-folded kernel outputs -> NCHW (metadata-only reshape in XLA).
    return [o.reshape(n, oc, ho, wo)
            for o, oc, (ho, wo) in zip(outs, out_chs, out_hw)]


def _prefp_reference(x, proj_weights):
    """Pure-JAX/XLA reference for numerical validation."""
    n, c, h, w = x.shape
    k = jnp.asarray(_SOBEL_SUM)
    xp = jnp.pad(x, ((0, 0), (0, 0), (1, 1), (1, 1)))
    edge = jnp.zeros_like(x)
    for di in range(3):
        for dj in range(3):
            edge = edge + k[di, dj] * xp[:, :, di:di + h, dj:dj + w]
    outs = []
    feat = edge
    for wt in proj_weights:
        nn_, cc, hh, ww = feat.shape
        feat = feat.reshape(nn_, cc, hh // 2, 2, ww // 2, 2).max(axis=(3, 5))
        y = jnp.einsum('oc,nchw->nohw', wt, feat)
        outs.append(y * jax.nn.sigmoid(y))
    return outs


if __name__ == "__main__":
    key = jax.random.PRNGKey(0)
    kx, k1, k2 = jax.random.split(key, 3)

    input_channels = 4
    output_channels = [8, 16]
    x = jax.random.normal(kx, (2, input_channels, 16, 16), dtype=jnp.float32)
    proj_weights = [
        0.1 * jax.random.normal(k1, (output_channels[0], input_channels), jnp.float32),
        0.1 * jax.random.normal(k2, (output_channels[1], input_channels), jnp.float32),
    ]

    outs = prefp_forward(x, proj_weights)
    for o in outs:
        jax.block_until_ready(o)

    # Expected shapes: (2, 8, 8, 8) and (2, 16, 4, 4)
    assert outs[0].shape == (2, 8, 8, 8), outs[0].shape
    assert outs[1].shape == (2, 16, 4, 4), outs[1].shape

    # Numerical check against a pure-JAX reference (exact SiLU -> tight tol).
    refs = _prefp_reference(x, proj_weights)
    for o, r in zip(outs, refs):
        assert jnp.allclose(o, r, rtol=2e-3, atol=2e-3), \
            float(jnp.max(jnp.abs(o - r)))

    print("KERNEL_OK")
</pallas_src>

<mosaic_0001>
module attributes {stable_mosaic.version = 11 : i64} {
  func.func @kernel(%arg0: i32, %arg1: memref<1x4x256xf32, #tpu.memory_space<vmem>>, %arg2: memref<256x256xf32, #tpu.memory_space<vmem>>, %arg3: memref<256x64xf32, #tpu.memory_space<vmem>>, %arg4: memref<256x64xf32, #tpu.memory_space<vmem>>, %arg5: memref<256x64xf32, #tpu.memory_space<vmem>>, %arg6: memref<256x64xf32, #tpu.memory_space<vmem>>, %arg7: memref<8x4xf32, #tpu.memory_space<vmem>>, %arg8: memref<64x16xf32, #tpu.memory_space<vmem>>, %arg9: memref<64x16xf32, #tpu.memory_space<vmem>>, %arg10: memref<64x16xf32, #tpu.memory_space<vmem>>, %arg11: memref<64x16xf32, #tpu.memory_space<vmem>>, %arg12: memref<16x4xf32, #tpu.memory_space<vmem>>, %arg13: memref<1x8x64xf32, #tpu.memory_space<vmem>>, %arg14: memref<1x16x16xf32, #tpu.memory_space<vmem>>) attributes {dimension_semantics = [#tpu.dimension_semantics<parallel>], iteration_bounds = array<i64: 2>, scalar_prefetch = 0 : i64, scratch_operands = 0 : i64, tpu.core_type = #tpu.core_type<tc>, window_params = [{transform_indices = @transform_0, window_bounds = array<i64: 1, 4, 256>}, {pipeline_mode = #tpu.pipeline_mode<synchronous>, transform_indices = @transform_1, window_bounds = array<i64: 256, 256>}, {pipeline_mode = #tpu.pipeline_mode<synchronous>, transform_indices = @transform_2, window_bounds = array<i64: 256, 64>}, {pipeline_mode = #tpu.pipeline_mode<synchronous>, transform_indices = @transform_3, window_bounds = array<i64: 256, 64>}, {pipeline_mode = #tpu.pipeline_mode<synchronous>, transform_indices = @transform_4, window_bounds = array<i64: 256, 64>}, {pipeline_mode = #tpu.pipeline_mode<synchronous>, transform_indices = @transform_5, window_bounds = array<i64: 256, 64>}, {pipeline_mode = #tpu.pipeline_mode<synchronous>, transform_indices = @transform_6, window_bounds = array<i64: 8, 4>}, {pipeline_mode = #tpu.pipeline_mode<synchronous>, transform_indices = @transform_7, window_bounds = array<i64: 64, 16>}, {pipeline_mode = #tpu.pipeline_mode<synchronous>, transform_indices = @transform_8, window_bounds = array<i64: 64, 16>}, {pipeline_mode = #tpu.pipeline_mode<synchronous>, transform_indices = @transform_9, window_bounds = array<i64: 64, 16>}, {pipeline_mode = #tpu.pipeline_mode<synchronous>, transform_indices = @transform_10, window_bounds = array<i64: 64, 16>}, {pipeline_mode = #tpu.pipeline_mode<synchronous>, transform_indices = @transform_11, window_bounds = array<i64: 16, 4>}, {transform_indices = @transform_12, window_bounds = array<i64: 1, 8, 64>}, {transform_indices = @transform_13, window_bounds = array<i64: 1, 16, 16>}]} {
    %c0 = arith.constant 0 : index
    %c0_0 = arith.constant 0 : index
    %c0_1 = arith.constant 0 : index
    %0 = vector.load %arg1[%c0, %c0_0, %c0_1] : memref<1x4x256xf32, #tpu.memory_space<vmem>>, vector<1x4x256xf32>
    %1 = vector.shape_cast %0 : vector<1x4x256xf32> to vector<4x256xf32>
    %c0_2 = arith.constant 0 : index
    %c0_3 = arith.constant 0 : index
    %2 = vector.load %arg2[%c0_2, %c0_3] : memref<256x256xf32, #tpu.memory_space<vmem>>, vector<256x256xf32>
    %cst = arith.constant dense<0.000000e+00> : vector<4x256xf32>
    %3 = tpu.matmul %1, %2, %cst {dimension_numbers = #tpu.dot_dimension_numbers<[1], [0], [0], [1], [0, 0, 1, 1], [], []>} : vector<4x256xf32>, vector<256x256xf32>, vector<4x256xf32> -> vector<4x256xf32>
    %c0_4 = arith.constant 0 : index
    %c0_5 = arith.constant 0 : index
    %4 = vector.load %arg3[%c0_4, %c0_5] : memref<256x64xf32, #tpu.memory_space<vmem>>, vector<256x64xf32>
    %cst_6 = arith.constant dense<0.000000e+00> : vector<4x64xf32>
    %5 = tpu.matmul %3, %4, %cst_6 {dimension_numbers = #tpu.dot_dimension_numbers<[1], [0], [0], [1], [0, 0, 1, 1], [], []>} : vector<4x256xf32>, vector<256x64xf32>, vector<4x64xf32> -> vector<4x64xf32>
    %c0_7 = arith.constant 0 : index
    %c0_8 = arith.constant 0 : index
    %6 = vector.load %arg4[%c0_7, %c0_8] : memref<256x64xf32, #tpu.memory_space<vmem>>, vector<256x64xf32>
    %cst_9 = arith.constant dense<0.000000e+00> : vector<4x64xf32>
    %7 = tpu.matmul %3, %6, %cst_9 {dimension_numbers = #tpu.dot_dimension_numbers<[1], [0], [0], [1], [0, 0, 1, 1], [], []>} : vector<4x256xf32>, vector<256x64xf32>, vector<4x64xf32> -> vector<4x64xf32>
    %c0_10 = arith.constant 0 : index
    %c0_11 = arith.constant 0 : index
    %8 = vector.load %arg5[%c0_10, %c0_11] : memref<256x64xf32, #tpu.memory_space<vmem>>, vector<256x64xf32>
    %cst_12 = arith.constant dense<0.000000e+00> : vector<4x64xf32>
    %9 = tpu.matmul %3, %8, %cst_12 {dimension_numbers = #tpu.dot_dimension_numbers<[1], [0], [0], [1], [0, 0, 1, 1], [], []>} : vector<4x256xf32>, vector<256x64xf32>, vector<4x64xf32> -> vector<4x64xf32>
    %c0_13 = arith.constant 0 : index
    %c0_14 = arith.constant 0 : index
    %10 = vector.load %arg6[%c0_13, %c0_14] : memref<256x64xf32, #tpu.memory_space<vmem>>, vector<256x64xf32>
    %cst_15 = arith.constant dense<0.000000e+00> : vector<4x64xf32>
    %11 = tpu.matmul %3, %10, %cst_15 {dimension_numbers = #tpu.dot_dimension_numbers<[1], [0], [0], [1], [0, 0, 1, 1], [], []>} : vector<4x256xf32>, vector<256x64xf32>, vector<4x64xf32> -> vector<4x64xf32>
    %12 = arith.maximumf %5, %7 : vector<4x64xf32>
    %13 = arith.maximumf %9, %11 : vector<4x64xf32>
    %14 = arith.maximumf %12, %13 : vector<4x64xf32>
    %c0_16 = arith.constant 0 : index
    %c0_17 = arith.constant 0 : index
    %15 = vector.load %arg7[%c0_16, %c0_17] : memref<8x4xf32, #tpu.memory_space<vmem>>, vector<8x4xf32>
    %cst_18 = arith.constant dense<0.000000e+00> : vector<8x64xf32>
    %16 = tpu.matmul %15, %14, %cst_18 {dimension_numbers = #tpu.dot_dimension_numbers<[1], [0], [0], [1], [0, 0, 1, 1], [], []>} : vector<8x4xf32>, vector<4x64xf32>, vector<8x64xf32> -> vector<8x64xf32>
    %cst_19 = arith.constant 0.000000e+00 : f32
    %17 = vector.broadcast %cst_19 : f32 to vector<8x64xf32>
    %18 = arith.subf %17, %16 : vector<8x64xf32>
    %19 = math.exp %18 : vector<8x64xf32>
    %cst_20 = arith.constant 1.000000e+00 : f32
    %20 = vector.broadcast %cst_20 : f32 to vector<8x64xf32>
    %21 = arith.addf %20, %19 : vector<8x64xf32>
    %cst_21 = arith.constant 1.000000e+00 : f32
    %22 = vector.broadcast %cst_21 : f32 to vector<8x64xf32>
    %23 = arith.divf %22, %21 : vector<8x64xf32>
    %24 = arith.mulf %16, %23 : vector<8x64xf32>
    %c0_22 = arith.constant 0 : index
    %c0_23 = arith.constant 0 : index
    %c0_24 = arith.constant 0 : index
    %25 = vector.load %arg13[%c0_22, %c0_23, %c0_24] : memref<1x8x64xf32, #tpu.memory_space<vmem>>, vector<1x8x64xf32>
    %26 = vector.shape_cast %25 : vector<1x8x64xf32> to vector<8x64xf32>
    %27 = vector.shape_cast %24 : vector<8x64xf32> to vector<1x8x64xf32>
    tpu.vector_store %arg13[%c0_22, %c0_23, %c0_24], %27 {strides = array<i32>} : memref<1x8x64xf32, #tpu.memory_space<vmem>>, vector<1x8x64xf32>,
    %c0_25 = arith.constant 0 : index
    %c0_26 = arith.constant 0 : index
    %28 = vector.load %arg8[%c0_25, %c0_26] : memref<64x16xf32, #tpu.memory_space<vmem>>, vector<64x16xf32>
    %cst_27 = arith.constant dense<0.000000e+00> : vector<4x16xf32>
    %29 = tpu.matmul %14, %28, %cst_27 {dimension_numbers = #tpu.dot_dimension_numbers<[1], [0], [0], [1], [0, 0, 1, 1], [], []>} : vector<4x64xf32>, vector<64x16xf32>, vector<4x16xf32> -> vector<4x16xf32>
    %c0_28 = arith.constant 0 : index
    %c0_29 = arith.constant 0 : index
    %30 = vector.load %arg9[%c0_28, %c0_29] : memref<64x16xf32, #tpu.memory_space<vmem>>, vector<64x16xf32>
    %cst_30 = arith.constant dense<0.000000e+00> : vector<4x16xf32>
    %31 = tpu.matmul %14, %30, %cst_30 {dimension_numbers = #tpu.dot_dimension_numbers<[1], [0], [0], [1], [0, 0, 1, 1], [], []>} : vector<4x64xf32>, vector<64x16xf32>, vector<4x16xf32> -> vector<4x16xf32>
    %c0_31 = arith.constant 0 : index
    %c0_32 = arith.constant 0 : index
    %32 = vector.load %arg10[%c0_31, %c0_32] : memref<64x16xf32, #tpu.memory_space<vmem>>, vector<64x16xf32>
    %cst_33 = arith.constant dense<0.000000e+00> : vector<4x16xf32>
    %33 = tpu.matmul %14, %32, %cst_33 {dimension_numbers = #tpu.dot_dimension_numbers<[1], [0], [0], [1], [0, 0, 1, 1], [], []>} : vector<4x64xf32>, vector<64x16xf32>, vector<4x16xf32> -> vector<4x16xf32>
    %c0_34 = arith.constant 0 : index
    %c0_35 = arith.constant 0 : index
    %34 = vector.load %arg11[%c0_34, %c0_35] : memref<64x16xf32, #tpu.memory_space<vmem>>, vector<64x16xf32>
    %cst_36 = arith.constant dense<0.000000e+00> : vector<4x16xf32>
    %35 = tpu.matmul %14, %34, %cst_36 {dimension_numbers = #tpu.dot_dimension_numbers<[1], [0], [0], [1], [0, 0, 1, 1], [], []>} : vector<4x64xf32>, vector<64x16xf32>, vector<4x16xf32> -> vector<4x16xf32>
    %36 = arith.maximumf %29, %31 : vector<4x16xf32>
    %37 = arith.maximumf %33, %35 : vector<4x16xf32>
    %38 = arith.maximumf %36, %37 : vector<4x16xf32>
    %c0_37 = arith.constant 0 : index
    %c0_38 = arith.constant 0 : index
    %39 = vector.load %arg12[%c0_37, %c0_38] : memref<16x4xf32, #tpu.memory_space<vmem>>, vector<16x4xf32>
    %cst_39 = arith.constant dense<0.000000e+00> : vector<16x16xf32>
    %40 = tpu.matmul %39, %38, %cst_39 {dimension_numbers = #tpu.dot_dimension_numbers<[1], [0], [0], [1], [0, 0, 1, 1], [], []>} : vector<16x4xf32>, vector<4x16xf32>, vector<16x16xf32> -> vector<16x16xf32>
    %cst_40 = arith.constant 0.000000e+00 : f32
    %41 = vector.broadcast %cst_40 : f32 to vector<16x16xf32>
    %42 = arith.subf %41, %40 : vector<16x16xf32>
    %43 = math.exp %42 : vector<16x16xf32>
    %cst_41 = arith.constant 1.000000e+00 : f32
    %44 = vector.broadcast %cst_41 : f32 to vector<16x16xf32>
    %45 = arith.addf %44, %43 : vector<16x16xf32>
    %cst_42 = arith.constant 1.000000e+00 : f32
    %46 = vector.broadcast %cst_42 : f32 to vector<16x16xf32>
    %47 = arith.divf %46, %45 : vector<16x16xf32>
    %48 = arith.mulf %40, %47 : vector<16x16xf32>
    %c0_43 = arith.constant 0 : index
    %c0_44 = arith.constant 0 : index
    %c0_45 = arith.constant 0 : index
    %49 = vector.load %arg14[%c0_43, %c0_44, %c0_45] : memref<1x16x16xf32, #tpu.memory_space<vmem>>, vector<1x16x16xf32>
    %50 = vector.shape_cast %49 : vector<1x16x16xf32> to vector<16x16xf32>
    %51 = vector.shape_cast %48 : vector<16x16xf32> to vector<1x16x16xf32>
    tpu.vector_store %arg14[%c0_43, %c0_44, %c0_45], %51 {strides = array<i32>} : memref<1x16x16xf32, #tpu.memory_space<vmem>>, vector<1x16x16xf32>,
    return
  }
  func.func @transform_0(%arg0: i32) -> (i32, i32, i32) {
    %c0_i32 = arith.constant 0 : i32
    %c0_i32_0 = arith.constant 0 : i32
    %c0_i32_1 = arith.constant 0 : i32
    return %arg0, %c0_i32, %c0_i32_0 : i32, i32, i32
  }
  func.func @transform_1(%arg0: i32) -> (i32, i32) {
    %c0_i32 = arith.constant 0 : i32
    %c0_i32_0 = arith.constant 0 : i32
    %c0_i32_1 = arith.constant 0 : i32
    return %c0_i32, %c0_i32_0 : i32, i32
  }
  func.func @transform_2(%arg0: i32) -> (i32, i32) {
    %c0_i32 = arith.constant 0 : i32
    %c0_i32_0 = arith.constant 0 : i32
    %c0_i32_1 = arith.constant 0 : i32
    return %c0_i32, %c0_i32_0 : i32, i32
  }
  func.func @transform_3(%arg0: i32) -> (i32, i32) {
    %c0_i32 = arith.constant 0 : i32
    %c0_i32_0 = arith.constant 0 : i32
    %c0_i32_1 = arith.constant 0 : i32
    return %c0_i32, %c0_i32_0 : i32, i32
  }
  func.func @transform_4(%arg0: i32) -> (i32, i32) {
    %c0_i32 = arith.constant 0 : i32
    %c0_i32_0 = arith.constant 0 : i32
    %c0_i32_1 = arith.constant 0 : i32
    return %c0_i32, %c0_i32_0 : i32, i32
  }
  func.func @transform_5(%arg0: i32) -> (i32, i32) {
    %c0_i32 = arith.constant 0 : i32
    %c0_i32_0 = arith.constant 0 : i32
    %c0_i32_1 = arith.constant 0 : i32
    return %c0_i32, %c0_i32_0 : i32, i32
  }
  func.func @transform_6(%arg0: i32) -> (i32, i32) {
    %c0_i32 = arith.constant 0 : i32
    %c0_i32_0 = arith.constant 0 : i32
    %c0_i32_1 = arith.constant 0 : i32
    return %c0_i32, %c0_i32_0 : i32, i32
  }
  func.func @transform_7(%arg0: i32) -> (i32, i32) {
    %c0_i32 = arith.constant 0 : i32
    %c0_i32_0 = arith.constant 0 : i32
    %c0_i32_1 = arith.constant 0 : i32
    return %c0_i32, %c0_i32_0 : i32, i32
  }
  func.func @transform_8(%arg0: i32) -> (i32, i32) {
    %c0_i32 = arith.constant 0 : i32
    %c0_i32_0 = arith.constant 0 : i32
    %c0_i32_1 = arith.constant 0 : i32
    return %c0_i32, %c0_i32_0 : i32, i32
  }
  func.func @transform_9(%arg0: i32) -> (i32, i32) {
    %c0_i32 = arith.constant 0 : i32
    %c0_i32_0 = arith.constant 0 : i32
    %c0_i32_1 = arith.constant 0 : i32
    return %c0_i32, %c0_i32_0 : i32, i32
  }
  func.func @transform_10(%arg0: i32) -> (i32, i32) {
    %c0_i32 = arith.constant 0 : i32
    %c0_i32_0 = arith.constant 0 : i32
    %c0_i32_1 = arith.constant 0 : i32
    return %c0_i32, %c0_i32_0 : i32, i32
  }
  func.func @transform_11(%arg0: i32) -> (i32, i32) {
    %c0_i32 = arith.constant 0 : i32
    %c0_i32_0 = arith.constant 0 : i32
    %c0_i32_1 = arith.constant 0 : i32
    return %c0_i32, %c0_i32_0 : i32, i32
  }
  func.func @transform_12(%arg0: i32) -> (i32, i32, i32) {
    %c0_i32 = arith.constant 0 : i32
    %c0_i32_0 = arith.constant 0 : i32
    %c0_i32_1 = arith.constant 0 : i32
    return %arg0, %c0_i32, %c0_i32_0 : i32, i32, i32
  }
  func.func @transform_13(%arg0: i32) -> (i32, i32, i32) {
    %c0_i32 = arith.constant 0 : i32
    %c0_i32_0 = arith.constant 0 : i32
    %c0_i32_1 = arith.constant 0 : i32
    return %arg0, %c0_i32, %c0_i32_0 : i32, i32, i32
  }
}

</mosaic_0001>

<llo_original>
// kernel: tpu_custom_call.1
$region0: #{tpu_custom_call.1}
  #allocation0 [shape = 'u32[]', space=smem, size = 0x4, offset = 0x4, fixed_abs, tag = 'smem constant byte address 0x4 - core index']
  #allocation1 [shape = 'u32[72,128]{1,0:T(1,128)}', space=vmem, size = 0x9000, scoped, tag = 'internal scratch']
  %s0 = inlined_call_operand.vmem [shape: f32[2,4,256], index: 0, kind: input, shape index: {}]
  %s1 = inlined_call_operand.vmem [shape: f32[256,256], index: 1, kind: input, shape index: {}]
  %s2 = inlined_call_operand.vmem [shape: f32[256,64], index: 2, kind: input, shape index: {}]
  %s3 = inlined_call_operand.vmem [shape: f32[256,64], index: 3, kind: input, shape index: {}]
  %s4 = inlined_call_operand.vmem [shape: f32[256,64], index: 4, kind: input, shape index: {}]
  %s5 = inlined_call_operand.vmem [shape: f32[256,64], index: 5, kind: input, shape index: {}]
  %s6 = inlined_call_operand.vmem [shape: f32[8,4], index: 6, kind: input, shape index: {}]
  %s7 = inlined_call_operand.vmem [shape: f32[64,16], index: 7, kind: input, shape index: {}]
  %s8 = inlined_call_operand.vmem [shape: f32[64,16], index: 8, kind: input, shape index: {}]
  %s9 = inlined_call_operand.vmem [shape: f32[64,16], index: 9, kind: input, shape index: {}]
  %s10 = inlined_call_operand.vmem [shape: f32[64,16], index: 10, kind: input, shape index: {}]
  %s11 = inlined_call_operand.vmem [shape: f32[16,4], index: 11, kind: input, shape index: {}]
  %s12 = inlined_call_operand.hbm [shape: f32[2,8,64], index: 12, kind: output, shape index: {0}]
  %s13 = inlined_call_operand.hbm [shape: f32[2,16,16], index: 13, kind: output, shape index: {1}]
  %14 = xla_tuple %s12, %s13
  %s15 = sld [smem:[#allocation0]]
  $region89: #{tpu_custom_call.1} parent=0
    _
  %s17 = ssub.s32 1, %s15
  %s18 = scalar_select 0, %s17, %s15
  $region1: #{tpu_custom_call.1} parent=0
    #allocation2 [shape = 'u8[8192]{0}', space=vmem, size = 0x2000, scoped, tag = 'output window, operand 0']
    #allocation3 [shape = 's32[2]{0}', space=sflag, size = 0x8, scoped, tag = 'scoped memory for tpu_custom_call.1']
    #allocation4 [shape = 'u8[16384]{0}', space=vmem, size = 0x4000, scoped, tag = 'output window, operand 1']
    #allocation5 [shape = 's32[2]{0}', space=sflag, size = 0x8, scoped, tag = 'scoped memory for tpu_custom_call.1']
    %19 = vsyncpa [#allocation3], 0
    %s20 = scalar_lea.sflag [#allocation3], 1
    %21 = vsyncpa %s20, 0
    %22 = vsyncpa [#allocation5], 0
    %s23 = scalar_lea.sflag [#allocation5], 1
    %24 = vsyncpa %s23, 0
    loop: start=0, step=1, limit=4
    $region2: #{tpu_custom_call.1} parent=1 // loop_pre_header
      _
    $region3: #{tpu_custom_call.1} parent=1 // loop_header
      %s26 = sphi 0, %s30
      %p27 = scmp.ge.s32.totalorder %s26, 4
      %s36 = sphi 0, %s38
      %s39 = sphi 0, %s36
      %s40 = sphi 0, %s39
      %s56 = sphi 0, %s40
      %s60 = sphi 0, %s60
      %s62 = sphi 0, %s60
      %s63 = sphi 0, %s62
      %s77 = sphi 0, %s63
      %s81 = sphi 0, %s81
      %s83 = sphi 0, %s81
      %s84 = sphi 0, %s83
      %s98 = sphi 0, %s84
      %s102 = sphi 0, %s102
      %s104 = sphi 0, %s102
      %s105 = sphi 0, %s104
      %s119 = sphi 0, %s105
      %s123 = sphi 0, %s123
      %s125 = sphi 0, %s123
      %s126 = sphi 0, %s125
      %s140 = sphi 0, %s126
      %s144 = sphi 0, %s144
      %s146 = sphi 0, %s144
      %s147 = sphi 0, %s146
      %s161 = sphi 0, %s147
      %s165 = sphi 0, %s165
      %s167 = sphi 0, %s165
      %s168 = sphi 0, %s167
      %s182 = sphi 0, %s168
      %s186 = sphi 0, %s186
      %s188 = sphi 0, %s186
      %s189 = sphi 0, %s188
      %s203 = sphi 0, %s189
      %s207 = sphi 0, %s207
      %s209 = sphi 0, %s207
      %s210 = sphi 0, %s209
      %s224 = sphi 0, %s210
      %s228 = sphi 0, %s228
      %s230 = sphi 0, %s228
      %s231 = sphi 0, %s230
      %s245 = sphi 0, %s231
      %s249 = sphi 0, %s249
      %s251 = sphi 0, %s249
      %s252 = sphi 0, %s251
      %s266 = sphi 0, %s252
      %s270 = sphi 0, %s270
      %s272 = sphi 0, %s270
      %s273 = sphi 0, %s272
      %s287 = sphi 0, %s273
      %s293 = sphi 0, %s295
      %s296 = sphi 0, %s293
      %s297 = sphi 0, %s296
      %s313 = sphi 0, %s297
      %s319 = sphi 0, %s321
      %s322 = sphi 0, %s319
      %s323 = sphi 0, %s322
      %s339 = sphi 0, %s323
    $region4: #{tpu_custom_call.1} parent=1 // loop_header_branch
      %29 = sbr.rel (%p27) target = $region8
    $region5: #{tpu_custom_call.1} parent=1 // loop_body
      %s31 = ssub.s32 %s26, 1
      %s32 = ssub.s32 %s26, 2
      %s33 = sadd.s32 %s26, 1
      %s34 = ssub.s32 %s26, %s33
      %p35 = scmp.eq.s32.totalorder %s34, 0
      %s37 = sadd.s32 %s36, 1
      %s38 = scalar_select %p35, %s36, %s37
      %p41 = pneg %p35
      %p42 = scmp.eq.s32.totalorder %s26, 1
      %p43 = por %p41, %p42
      %p44 = scmp.ne.s32.totalorder %s36, %s39
      %p45 = scmp.eq.s32.totalorder %s26, 0
      %p46 = por %p44, %p45
      %p47 = scmp.ne.s32.totalorder %s36, %s39
      %p48 = scmp.eq.s32.totalorder %s31, 1
      %p49 = por %p47, %p48
      %p50 = scmp.ne.s32.totalorder %s39, %s40
      %p51 = scmp.eq.s32.totalorder %s31, 0
      %p52 = por %p50, %p51
      %p53 = scmp.ne.s32.totalorder %s39, %s40
      %p54 = scmp.eq.s32.totalorder %s32, 1
      %p55 = por %p53, %p54
      %p57 = scmp.ne.s32.totalorder %s40, %s56
      %p58 = scmp.eq.s32.totalorder %s32, 0
      %p59 = por %p57, %p58
      %s61 = sadd.s32 %s60, 1
      %p64 = scmp.eq.s32.totalorder %s26, 1
      %p65 = scmp.ne.s32.totalorder %s60, %s62
      %p66 = scmp.eq.s32.totalorder %s26, 0
      %p67 = por %p65, %p66
      %p68 = scmp.ne.s32.totalorder %s60, %s62
      %p69 = scmp.eq.s32.totalorder %s31, 1
      %p70 = por %p68, %p69
      %p71 = scmp.ne.s32.totalorder %s62, %s63
      %p72 = scmp.eq.s32.totalorder %s31, 0
      %p73 = por %p71, %p72
      %p74 = scmp.ne.s32.totalorder %s62, %s63
      %p75 = scmp.eq.s32.totalorder %s32, 1
      %p76 = por %p74, %p75
      %p78 = scmp.ne.s32.totalorder %s63, %s77
      %p79 = scmp.eq.s32.totalorder %s32, 0
      %p80 = por %p78, %p79
      %s82 = sadd.s32 %s81, 1
      %p85 = scmp.eq.s32.totalorder %s26, 1
      %p86 = scmp.ne.s32.totalorder %s81, %s83
      %p87 = scmp.eq.s32.totalorder %s26, 0
      %p88 = por %p86, %p87
      %p89 = scmp.ne.s32.totalorder %s81, %s83
      %p90 = scmp.eq.s32.totalorder %s31, 1
      %p91 = por %p89, %p90
      %p92 = scmp.ne.s32.totalorder %s83, %s84
      %p93 = scmp.eq.s32.totalorder %s31, 0
      %p94 = por %p92, %p93
      %p95 = scmp.ne.s32.totalorder %s83, %s84
      %p96 = scmp.eq.s32.totalorder %s32, 1
      %p97 = por %p95, %p96
      %p99 = scmp.ne.s32.totalorder %s84, %s98
      %p100 = scmp.eq.s32.totalorder %s32, 0
      %p101 = por %p99, %p100
      %s103 = sadd.s32 %s102, 1
      %p106 = scmp.eq.s32.totalorder %s26, 1
      %p107 = scmp.ne.s32.totalorder %s102, %s104
      %p108 = scmp.eq.s32.totalorder %s26, 0
      %p109 = por %p107, %p108
      %p110 = scmp.ne.s32.totalorder %s102, %s104
      %p111 = scmp.eq.s32.totalorder %s31, 1
      %p112 = por %p110, %p111
      %p113 = scmp.ne.s32.totalorder %s104, %s105
      %p114 = scmp.eq.s32.totalorder %s31, 0
      %p115 = por %p113, %p114
      %p116 = scmp.ne.s32.totalorder %s104, %s105
      %p117 = scmp.eq.s32.totalorder %s32, 1
      %p118 = por %p116, %p117
      %p120 = scmp.ne.s32.totalorder %s105, %s119
      %p121 = scmp.eq.s32.totalorder %s32, 0
      %p122 = por %p120, %p121
      %s124 = sadd.s32 %s123, 1
      %p127 = scmp.eq.s32.totalorder %s26, 1
      %p128 = scmp.ne.s32.totalorder %s123, %s125
      %p129 = scmp.eq.s32.totalorder %s26, 0
      %p130 = por %p128, %p129
      %p131 = scmp.ne.s32.totalorder %s123, %s125
      %p132 = scmp.eq.s32.totalorder %s31, 1
      %p133 = por %p131, %p132
      %p134 = scmp.ne.s32.totalorder %s125, %s126
      %p135 = scmp.eq.s32.totalorder %s31, 0
      %p136 = por %p134, %p135
      %p137 = scmp.ne.s32.totalorder %s125, %s126
      %p138 = scmp.eq.s32.totalorder %s32, 1
      %p139 = por %p137, %p138
      %p141 = scmp.ne.s32.totalorder %s126, %s140
      %p142 = scmp.eq.s32.totalorder %s32, 0
      %p143 = por %p141, %p142
      %s145 = sadd.s32 %s144, 1
      %p148 = scmp.eq.s32.totalorder %s26, 1
      %p149 = scmp.ne.s32.totalorder %s144, %s146
      %p150 = scmp.eq.s32.totalorder %s26, 0
      %p151 = por %p149, %p150
      %p152 = scmp.ne.s32.totalorder %s144, %s146
      %p153 = scmp.eq.s32.totalorder %s31, 1
      %p154 = por %p152, %p153
      %p155 = scmp.ne.s32.totalorder %s146, %s147
      %p156 = scmp.eq.s32.totalorder %s31, 0
      %p157 = por %p155, %p156
      %p158 = scmp.ne.s32.totalorder %s146, %s147
      %p159 = scmp.eq.s32.totalorder %s32, 1
      %p160 = por %p158, %p159
      %p162 = scmp.ne.s32.totalorder %s147, %s161
      %p163 = scmp.eq.s32.totalorder %s32, 0
      %p164 = por %p162, %p163
      %s166 = sadd.s32 %s165, 1
      %p169 = scmp.eq.s32.totalorder %s26, 1
      %p170 = scmp.ne.s32.totalorder %s165, %s167
      %p171 = scmp.eq.s32.totalorder %s26, 0
      %p172 = por %p170, %p171
      %p173 = scmp.ne.s32.totalorder %s165, %s167
      %p174 = scmp.eq.s32.totalorder %s31, 1
      %p175 = por %p173, %p174
      %p176 = scmp.ne.s32.totalorder %s167, %s168
      %p177 = scmp.eq.s32.totalorder %s31, 0
      %p178 = por %p176, %p177
      %p179 = scmp.ne.s32.totalorder %s167, %s168
      %p180 = scmp.eq.s32.totalorder %s32, 1
      %p181 = por %p179, %p180
      %p183 = scmp.ne.s32.totalorder %s168, %s182
      %p184 = scmp.eq.s32.totalorder %s32, 0
      %p185 = por %p183, %p184
      %s187 = sadd.s32 %s186, 1
      %p190 = scmp.eq.s32.totalorder %s26, 1
      %p191 = scmp.ne.s32.totalorder %s186, %s188
      %p192 = scmp.eq.s32.totalorder %s26, 0
      %p193 = por %p191, %p192
      %p194 = scmp.ne.s32.totalorder %s186, %s188
      %p195 = scmp.eq.s32.totalorder %s31, 1
      %p196 = por %p194, %p195
      %p197 = scmp.ne.s32.totalorder %s188, %s189
      %p198 = scmp.eq.s32.totalorder %s31, 0
      %p199 = por %p197, %p198
      %p200 = scmp.ne.s32.totalorder %s188, %s189
      %p201 = scmp.eq.s32.totalorder %s32, 1
      %p202 = por %p200, %p201
      %p204 = scmp.ne.s32.totalorder %s189, %s203
      %p205 = scmp.eq.s32.totalorder %s32, 0
      %p206 = por %p204, %p205
      %s208 = sadd.s32 %s207, 1
      %p211 = scmp.eq.s32.totalorder %s26, 1
      %p212 = scmp.ne.s32.totalorder %s207, %s209
      %p213 = scmp.eq.s32.totalorder %s26, 0
      %p214 = por %p212, %p213
      %p215 = scmp.ne.s32.totalorder %s207, %s209
      %p216 = scmp.eq.s32.totalorder %s31, 1
      %p217 = por %p215, %p216
      %p218 = scmp.ne.s32.totalorder %s209, %s210
      %p219 = scmp.eq.s32.totalorder %s31, 0
      %p220 = por %p218, %p219
      %p221 = scmp.ne.s32.totalorder %s209, %s210
      %p222 = scmp.eq.s32.totalorder %s32, 1
      %p223 = por %p221, %p222
      %p225 = scmp.ne.s32.totalorder %s210, %s224
      %p226 = scmp.eq.s32.totalorder %s32, 0
      %p227 = por %p225, %p226
      %s229 = sadd.s32 %s228, 1
      %p232 = scmp.eq.s32.totalorder %s26, 1
      %p233 = scmp.ne.s32.totalorder %s228, %s230
      %p234 = scmp.eq.s32.totalorder %s26, 0
      %p235 = por %p233, %p234
      %p236 = scmp.ne.s32.totalorder %s228, %s230
      %p237 = scmp.eq.s32.totalorder %s31, 1
      %p238 = por %p236, %p237
      %p239 = scmp.ne.s32.totalorder %s230, %s231
      %p240 = scmp.eq.s32.totalorder %s31, 0
      %p241 = por %p239, %p240
      %p242 = scmp.ne.s32.totalorder %s230, %s231
      %p243 = scmp.eq.s32.totalorder %s32, 1
      %p244 = por %p242, %p243
      %p246 = scmp.ne.s32.totalorder %s231, %s245
      %p247 = scmp.eq.s32.totalorder %s32, 0
      %p248 = por %p246, %p247
      %s250 = sadd.s32 %s249, 1
      %p253 = scmp.eq.s32.totalorder %s26, 1
      %p254 = scmp.ne.s32.totalorder %s249, %s251
      %p255 = scmp.eq.s32.totalorder %s26, 0
      %p256 = por %p254, %p255
      %p257 = scmp.ne.s32.totalorder %s249, %s251
      %p258 = scmp.eq.s32.totalorder %s31, 1
      %p259 = por %p257, %p258
      %p260 = scmp.ne.s32.totalorder %s251, %s252
      %p261 = scmp.eq.s32.totalorder %s31, 0
      %p262 = por %p260, %p261
      %p263 = scmp.ne.s32.totalorder %s251, %s252
      %p264 = scmp.eq.s32.totalorder %s32, 1
      %p265 = por %p263, %p264
      %p267 = scmp.ne.s32.totalorder %s252, %s266
      %p268 = scmp.eq.s32.totalorder %s32, 0
      %p269 = por %p267, %p268
      %s271 = sadd.s32 %s270, 1
      %p274 = scmp.eq.s32.totalorder %s26, 1
      %p275 = scmp.ne.s32.totalorder %s270, %s272
      %p276 = scmp.eq.s32.totalorder %s26, 0
      %p277 = por %p275, %p276
      %p278 = scmp.ne.s32.totalorder %s270, %s272
      %p279 = scmp.eq.s32.totalorder %s31, 1
      %p280 = por %p278, %p279
      %p281 = scmp.ne.s32.totalorder %s272, %s273
      %p282 = scmp.eq.s32.totalorder %s31, 0
      %p283 = por %p281, %p282
      %p284 = scmp.ne.s32.totalorder %s272, %s273
      %p285 = scmp.eq.s32.totalorder %s32, 1
      %p286 = por %p284, %p285
      %p288 = scmp.ne.s32.totalorder %s273, %s287
      %p289 = scmp.eq.s32.totalorder %s32, 0
      %p290 = por %p288, %p289
      %s291 = ssub.s32 %s26, %s33
      %p292 = scmp.eq.s32.totalorder %s291, 0
      %s294 = sadd.s32 %s293, 1
      %s295 = scalar_select %p292, %s293, %s294
      %p298 = pneg %p292
      %p299 = scmp.eq.s32.totalorder %s26, 1
      %p300 = por %p298, %p299
      %p301 = scmp.ne.s32.totalorder %s293, %s296
      %p302 = scmp.eq.s32.totalorder %s26, 0
      %p303 = por %p301, %p302
      %p304 = scmp.ne.s32.totalorder %s293, %s296
      %p305 = scmp.eq.s32.totalorder %s31, 1
      %p306 = por %p304, %p305
      %p307 = scmp.ne.s32.totalorder %s296, %s297
      %p308 = scmp.eq.s32.totalorder %s31, 0
      %p309 = por %p307, %p308
      %p310 = scmp.ne.s32.totalorder %s296, %s297
      %p311 = scmp.eq.s32.totalorder %s32, 1
      %p312 = por %p310, %p311
      %p314 = scmp.ne.s32.totalorder %s297, %s313
      %p315 = scmp.eq.s32.totalorder %s32, 0
      %p316 = por %p314, %p315
      %s317 = ssub.s32 %s26, %s33
      %p318 = scmp.eq.s32.totalorder %s317, 0
      %s320 = sadd.s32 %s319, 1
      %s321 = scalar_select %p318, %s319, %s320
      %p324 = pneg %p318
      %p325 = scmp.eq.s32.totalorder %s26, 1
      %p326 = por %p324, %p325
      %p327 = scmp.ne.s32.totalorder %s319, %s322
      %p328 = scmp.eq.s32.totalorder %s26, 0
      %p329 = por %p327, %p328
      %p330 = scmp.ne.s32.totalorder %s319, %s322
      %p331 = scmp.eq.s32.totalorder %s31, 1
      %p332 = por %p330, %p331
      %p333 = scmp.ne.s32.totalorder %s322, %s323
      %p334 = scmp.eq.s32.totalorder %s31, 0
      %p335 = por %p333, %p334
      %p336 = scmp.ne.s32.totalorder %s322, %s323
      %p337 = scmp.eq.s32.totalorder %s32, 1
      %p338 = por %p336, %p337
      %p340 = scmp.ne.s32.totalorder %s323, %s339
      %p341 = scmp.eq.s32.totalorder %s32, 0
      %p342 = por %p340, %p341
      %p343 = scmp.le.s32.totalorder 1, %s26
      %p344 = scmp.lt.s32.totalorder %s26, 3
      %p345 = pnand %p343, %p344
      %p346 = pneg %p345
      // Predicated region
      $region9: #{tpu_custom_call.1} parent=5 // pred_check
        _
      $region10: #{tpu_custom_call.1} parent=5 // pred_check_branch
        %348 = sbr.rel (%p345) target = $region12
      $region11: #{tpu_custom_call.1} parent=5 // pred_region
        %s349 = ssub.s32 %s26, 1
        // Predicated region
        $region13: #{tpu_custom_call.1} parent=11 // pred_check
          %p350 = pneg %p73
        $region14: #{tpu_custom_call.1} parent=11 // pred_check_branch
          %352 = sbr.rel (%p350) target = $region16
        $region15: #{tpu_custom_call.1} parent=11 // pred_region
          _
        $region16: #{tpu_custom_call.1} parent=11 // pred_fallthru
          _
        // Predicated region
        $region17: #{tpu_custom_call.1} parent=11 // pred_check
          %p353 = pneg %p94
        $region18: #{tpu_custom_call.1} parent=11 // pred_check_branch
          %355 = sbr.rel (%p353) target = $region20
        $region19: #{tpu_custom_call.1} parent=11 // pred_region
          _
        $region20: #{tpu_custom_call.1} parent=11 // pred_fallthru
          _
        // Predicated region
        $region21: #{tpu_custom_call.1} parent=11 // pred_check
          %p356 = pneg %p115
        $region22: #{tpu_custom_call.1} parent=11 // pred_check_branch
          %358 = sbr.rel (%p356) target = $region24
        $region23: #{tpu_custom_call.1} parent=11 // pred_region
          _
        $region24: #{tpu_custom_call.1} parent=11 // pred_fallthru
          _
        // Predicated region
        $region25: #{tpu_custom_call.1} parent=11 // pred_check
          %p359 = pneg %p136
        $region26: #{tpu_custom_call.1} parent=11 // pred_check_branch
          %361 = sbr.rel (%p359) target = $region28
        $region27: #{tpu_custom_call.1} parent=11 // pred_region
          _
        $region28: #{tpu_custom_call.1} parent=11 // pred_fallthru
          _
        // Predicated region
        $region29: #{tpu_custom_call.1} parent=11 // pred_check
          %p362 = pneg %p157
        $region30: #{tpu_custom_call.1} parent=11 // pred_check_branch
          %364 = sbr.rel (%p362) target = $region32
        $region31: #{tpu_custom_call.1} parent=11 // pred_region
          _
        $region32: #{tpu_custom_call.1} parent=11 // pred_fallthru
          _
        // Predicated region
        $region33: #{tpu_custom_call.1} parent=11 // pred_check
          %p365 = pneg %p178
        $region34: #{tpu_custom_call.1} parent=11 // pred_check_branch
          %367 = sbr.rel (%p365) target = $region36
        $region35: #{tpu_custom_call.1} parent=11 // pred_region
          _
        $region36: #{tpu_custom_call.1} parent=11 // pred_fallthru
          _
        // Predicated region
        $region37: #{tpu_custom_call.1} parent=11 // pred_check
          %p368 = pneg %p199
        $region38: #{tpu_custom_call.1} parent=11 // pred_check_branch
          %370 = sbr.rel (%p368) target = $region40
        $region39: #{tpu_custom_call.1} parent=11 // pred_region
          _
        $region40: #{tpu_custom_call.1} parent=11 // pred_fallthru
          _
        // Predicated region
        $region41: #{tpu_custom_call.1} parent=11 // pred_check
          %p371 = pneg %p220
        $region42: #{tpu_custom_call.1} parent=11 // pred_check_branch
          %373 = sbr.rel (%p371) target = $region44
        $region43: #{tpu_custom_call.1} parent=11 // pred_region
          _
        $region44: #{tpu_custom_call.1} parent=11 // pred_fallthru
          _
        // Predicated region
        $region45: #{tpu_custom_call.1} parent=11 // pred_check
          %p374 = pneg %p241
        $region46: #{tpu_custom_call.1} parent=11 // pred_check_branch
          %376 = sbr.rel (%p374) target = $region48
        $region47: #{tpu_custom_call.1} parent=11 // pred_region
          _
        $region48: #{tpu_custom_call.1} parent=11 // pred_fallthru
          _
        // Predicated region
        $region49: #{tpu_custom_call.1} parent=11 // pred_check
          %p377 = pneg %p262
        $region50: #{tpu_custom_call.1} parent=11 // pred_check_branch
          %379 = sbr.rel (%p377) target = $region52
        $region51: #{tpu_custom_call.1} parent=11 // pred_region
          _
        $region52: #{tpu_custom_call.1} parent=11 // pred_fallthru
          _
        // Predicated region
        $region53: #{tpu_custom_call.1} parent=11 // pred_check
          %p380 = pneg %p283
        $region54: #{tpu_custom_call.1} parent=11 // pred_check_branch
          %382 = sbr.rel (%p380) target = $region56
        $region55: #{tpu_custom_call.1} parent=11 // pred_region
          _
        $region56: #{tpu_custom_call.1} parent=11 // pred_fallthru
          _
      $region12: #{tpu_custom_call.1} parent=5 // pred_fallthru
        _
      %p383 = scmp.lt.s32.totalorder %s26, 2
      // Predicated region
      $region57: #{tpu_custom_call.1} parent=5 // pred_check
        %p384 = pneg %p383
      $region58: #{tpu_custom_call.1} parent=5 // pred_check_branch
        %386 = sbr.rel (%p384) target = $region60
      $region59: #{tpu_custom_call.1} parent=5 // pred_region
        // Predicated region
        $region61: #{tpu_custom_call.1} parent=59 // pred_check
          %p387 = pneg %p46
        $region62: #{tpu_custom_call.1} parent=59 // pred_check_branch
          %389 = sbr.rel (%p387) target = $region64
        $region63: #{tpu_custom_call.1} parent=59 // pred_region
          %p390 = scmp.lt.s32.totalorder %s26, 1
          %s391 = scalar_select %p390, %s26, 1
          %s392 = smul.addr %s391, 2
          %s393 = smul.addr %s392, 4
          %s394 = scalar_lea.vmem %s0, %s393
        $region64: #{tpu_custom_call.1} parent=59 // pred_fallthru
          _
      $region60: #{tpu_custom_call.1} parent=5 // pred_fallthru
        _
      %p395 = scmp.le.s32.totalorder 1, %s26
      %p396 = scmp.lt.s32.totalorder %s26, 3
      %p397 = pnand %p395, %p396
      %p398 = pneg %p397
      // Predicated region
      $region65: #{tpu_custom_call.1} parent=5 // pred_check
        _
      $region66: #{tpu_custom_call.1} parent=5 // pred_check_branch
        %400 = sbr.rel (%p397) target = $region68
      $region67: #{tpu_custom_call.1} parent=5 // pred_region
        %s401 = ssub.s32 %s26, 1
        %p402 = scmp.lt.s32.totalorder %s31, 1
        %s403 = scalar_select %p402, %s31, 1
        %s404 = smul.addr %s403, 2
        %s405 = smul.addr %s404, 4
        %s406 = scalar_lea.vmem %s0, %s405
        %p407 = pneg %p52
        %p408 = pneg %p49
        %p409 = pneg %p73
        %p410 = pneg %p70
        %p411 = pneg %p94
        %p412 = pneg %p91
        %p413 = pneg %p115
        %p414 = pneg %p112
        %p415 = pneg %p136
        %p416 = pneg %p133
        %p417 = pneg %p157
        %p418 = pneg %p154
        %p419 = pneg %p178
        %p420 = pneg %p175
        %p421 = pneg %p199
        %p422 = pneg %p196
        %p423 = pneg %p220
        %p424 = pneg %p217
        %p425 = pneg %p241
        %p426 = pneg %p238
        %p427 = pneg %p262
        %p428 = pneg %p259
        %p429 = pneg %p283
        %p430 = pneg %p280
        %p431 = pneg %p309
        %p432 = pneg %p306
        %s433 = sand.u32 %s296, 1
        %s434 = scalar_lea.sflag [#allocation3], %s433
        %s435 = sand.u32 %s296, 1
        %s436 = smul.addr %s435, 8
        %s437 = scalar_lea.vmem [#allocation2], %s436
        %p438 = pneg %p335
        %p439 = pneg %p332
        %s440 = sand.u32 %s322, 1
        %s441 = scalar_lea.sflag [#allocation5], %s440
        %s442 = sand.u32 %s322, 1
        %s443 = smul.addr %s442, 16
        %s444 = scalar_lea.vmem [#allocation4], %s443
        %p445 = scmp.lt.s32.totalorder %s31, 1
        %s446 = scalar_select %p445, %s31, 1
        %s447 = smul.addr %s446, 2
        %s448 = smul.addr %s447, 4
        %s449 = scalar_lea.vmem %s0, %s448
        %v450 = vld [vmem:[%s449] sm:$0xff]
        %v451 = vld [vmem:[%s1] sm:$0xff]
        %v452 = vld [vmem:[%s1 + $0x8] sm:$0xff]
        %v453 = vld [vmem:[%s1 + $0x10] sm:$0xff]
        %v454 = vld [vmem:[%s1 + $0x18] sm:$0xff]
        %v455 = vld [vmem:[%s1 + $0x20] sm:$0xff]
        %v456 = vld [vmem:[%s1 + $0x28] sm:$0xff]
        %v457 = vld [vmem:[%s1 + $0x30] sm:$0xff]
        %v458 = vld [vmem:[%s1 + $0x38] sm:$0xff]
        %v459 = vld [vmem:[%s1 + $0x40] sm:$0xff]
        %v460 = vld [vmem:[%s1 + $0x48] sm:$0xff]
        %v461 = vld [vmem:[%s1 + $0x50] sm:$0xff]
        %v462 = vld [vmem:[%s1 + $0x58] sm:$0xff]
        %v463 = vld [vmem:[%s1 + $0x60] sm:$0xff]
        %v464 = vld [vmem:[%s1 + $0x68] sm:$0xff]
        %v465 = vld [vmem:[%s1 + $0x70] sm:$0xff]
        %v466 = vld [vmem:[%s1 + $0x78] sm:$0xff]
        %v467 = vld [vmem:[%s1 + $0x80] sm:$0xff]
        %v468 = vld [vmem:[%s1 + $0x88] sm:$0xff]
        %v469 = vld [vmem:[%s1 + $0x90] sm:$0xff]
        %v470 = vld [vmem:[%s1 + $0x98] sm:$0xff]
        %v471 = vld [vmem:[%s1 + $0xa0] sm:$0xff]
        %v472 = vld [vmem:[%s1 + $0xa8] sm:$0xff]
        %v473 = vld [vmem:[%s1 + $0xb0] sm:$0xff]
        %v474 = vld [vmem:[%s1 + $0xb8] sm:$0xff]
        %v475 = vld [vmem:[%s1 + $0xc0] sm:$0xff]
        %v476 = vld [vmem:[%s1 + $0xc8] sm:$0xff]
        %v477 = vld [vmem:[%s1 + $0xd0] sm:$0xff]
        %v478 = vld [vmem:[%s1 + $0xd8] sm:$0xff]
        %v479 = vld [vmem:[%s1 + $0xe0] sm:$0xff]
        %v480 = vld [vmem:[%s1 + $0xe8] sm:$0xff]
        %v481 = vld [vmem:[%s1 + $0xf0] sm:$0xff]
        %v482 = vld [vmem:[%s1 + $0xf8] sm:$0xff]
        %v483 = vld [vmem:[%s1 + $0x100] sm:$0xff]
        %v484 = vld [vmem:[%s1 + $0x108] sm:$0xff]
        %v485 = vld [vmem:[%s1 + $0x110] sm:$0xff]
        %v486 = vld [vmem:[%s1 + $0x118] sm:$0xff]
        %v487 = vld [vmem:[%s1 + $0x120] sm:$0xff]
        %v488 = vld [vmem:[%s1 + $0x128] sm:$0xff]
        %v489 = vld [vmem:[%s1 + $0x130] sm:$0xff]
        %v490 = vld [vmem:[%s1 + $0x138] sm:$0xff]
        %v491 = vld [vmem:[%s1 + $0x140] sm:$0xff]
        %v492 = vld [vmem:[%s1 + $0x148] sm:$0xff]
        %v493 = vld [vmem:[%s1 + $0x150] sm:$0xff]
        %v494 = vld [vmem:[%s1 + $0x158] sm:$0xff]
        %v495 = vld [vmem:[%s1 + $0x160] sm:$0xff]
        %v496 = vld [vmem:[%s1 + $0x168] sm:$0xff]
        %v497 = vld [vmem:[%s1 + $0x170] sm:$0xff]
        %v498 = vld [vmem:[%s1 + $0x178] sm:$0xff]
        %v499 = vld [vmem:[%s1 + $0x180] sm:$0xff]
        %v500 = vld [vmem:[%s1 + $0x188] sm:$0xff]
        %v501 = vld [vmem:[%s1 + $0x190] sm:$0xff]
        %v502 = vld [vmem:[%s1 + $0x198] sm:$0xff]
        %v503 = vld [vmem:[%s1 + $0x1a0] sm:$0xff]
        %v504 = vld [vmem:[%s1 + $0x1a8] sm:$0xff]
        %v505 = vld [vmem:[%s1 + $0x1b0] sm:$0xff]
        %v506 = vld [vmem:[%s1 + $0x1b8] sm:$0xff]
        %v507 = vld [vmem:[%s1 + $0x1c0] sm:$0xff]
        %v508 = vld [vmem:[%s1 + $0x1c8] sm:$0xff]
        %v509 = vld [vmem:[%s1 + $0x1d0] sm:$0xff]
        %v510 = vld [vmem:[%s1 + $0x1d8] sm:$0xff]
        %v511 = vld [vmem:[%s1 + $0x1e0] sm:$0xff]
        %v512 = vld [vmem:[%s1 + $0x1e8] sm:$0xff]
        %v513 = vld [vmem:[%s1 + $0x1f0] sm:$0xff]
        %v514 = vld [vmem:[%s1 + $0x1f8] sm:$0xff]
        %516 = vst [vmem:[#allocation1] ss:$2 sm:$0xff] %v450
        %v517 = vld.sshfl [vmem:[#allocation1] sm:$0xff pattern:$0x75316420]
        %v518 = vld.sshfl [vmem:[#allocation1 + $0x8] sm:$0xff pattern:$0x75316420]
        %521 = vmatpush.msra.mxu0 %v481
        %522 = vmatpush.msra.mxu0 %v479
        %523 = vmatpush.msra.mxu0 %v477
        %524 = vmatpush.msra.mxu0 %v475
        %525 = vmatpush.msra.mxu0 %v473
        %526 = vmatpush.msra.mxu0 %v471
        %527 = vmatpush.msra.mxu0 %v469
        %528 = vmatpush.msra.mxu0 %v467
        %529 = vmatpush.msra.mxu0 %v465
        %530 = vmatpush.msra.mxu0 %v463
        %531 = vmatpush.msra.mxu0 %v461
        %532 = vmatpush.msra.mxu0 %v459
        %533 = vmatpush.msra.mxu0 %v457
        %534 = vmatpush.msra.mxu0 %v455
        %535 = vmatpush.msra.mxu0 %v453
        %536 = vmatpush.msra.mxu0 %v451
        %537 = vmatmul.f32.gmra.mxu0 %v517
        %v538 = vpop.f32.mrf.mxu0
        %v539 = vadd.f32 0.0, %v538
        %540 = vdwg.mxu0
        %541 = vmatpush.msra.mxu0 %v513
        %542 = vmatpush.msra.mxu0 %v511
        %543 = vmatpush.msra.mxu0 %v509
        %544 = vmatpush.msra.mxu0 %v507
        %545 = vmatpush.msra.mxu0 %v505
        %546 = vmatpush.msra.mxu0 %v503
        %547 = vmatpush.msra.mxu0 %v501
        %548 = vmatpush.msra.mxu0 %v499
        %549 = vmatpush.msra.mxu0 %v497
        %550 = vmatpush.msra.mxu0 %v495
        %551 = vmatpush.msra.mxu0 %v493
        %552 = vmatpush.msra.mxu0 %v491
        %553 = vmatpush.msra.mxu0 %v489
        %554 = vmatpush.msra.mxu0 %v487
        %555 = vmatpush.msra.mxu0 %v485
        %556 = vmatpush.msra.mxu0 %v483
        %557 = vmatmul.f32.gmra.mxu0 %v518
        %v558 = vpop.f32.mrf.mxu0
        %v559 = vadd.f32 %v539, %v558
        %560 = vdwg.mxu0
        %561 = vmatpush.msra.mxu0 %v482
        %562 = vmatpush.msra.mxu0 %v480
        %563 = vmatpush.msra.mxu0 %v478
        %564 = vmatpush.msra.mxu0 %v476
        %565 = vmatpush.msra.mxu0 %v474
        %566 = vmatpush.msra.mxu0 %v472
        %567 = vmatpush.msra.mxu0 %v470
        %568 = vmatpush.msra.mxu0 %v468
        %569 = vmatpush.msra.mxu0 %v466
        %570 = vmatpush.msra.mxu0 %v464
        %571 = vmatpush.msra.mxu0 %v462
        %572 = vmatpush.msra.mxu0 %v460
        %573 = vmatpush.msra.mxu0 %v458
        %574 = vmatpush.msra.mxu0 %v456
        %575 = vmatpush.msra.mxu0 %v454
        %576 = vmatpush.msra.mxu0 %v452
        %577 = vmatmul.f32.gmra.mxu0 %v517
        %v578 = vpop.f32.mrf.mxu0
        %v579 = vadd.f32 0.0, %v578
        %580 = vdwg.mxu0
        %581 = vmatpush.msra.mxu0 %v514
        %582 = vmatpush.msra.mxu0 %v512
        %583 = vmatpush.msra.mxu0 %v510
        %584 = vmatpush.msra.mxu0 %v508
        %585 = vmatpush.msra.mxu0 %v506
        %586 = vmatpush.msra.mxu0 %v504
        %587 = vmatpush.msra.mxu0 %v502
        %588 = vmatpush.msra.mxu0 %v500
        %589 = vmatpush.msra.mxu0 %v498
        %590 = vmatpush.msra.mxu0 %v496
        %591 = vmatpush.msra.mxu0 %v494
        %592 = vmatpush.msra.mxu0 %v492
        %593 = vmatpush.msra.mxu0 %v490
        %594 = vmatpush.msra.mxu0 %v488
        %595 = vmatpush.msra.mxu0 %v486
        %596 = vmatpush.msra.mxu0 %v484
        %597 = vmatmul.f32.gmra.mxu0 %v518
        %v598 = vpop.f32.mrf.mxu0
        %v599 = vadd.f32 %v579, %v598
        %600 = vdwg.mxu0
        %v601 = vld [vmem:[%s2] sm:$0xff]
        %v602 = vld [vmem:[%s2 + $0x8] sm:$0xff]
        %v603 = vld [vmem:[%s2 + $0x10] sm:$0xff]
        %v604 = vld [vmem:[%s2 + $0x18] sm:$0xff]
        %v605 = vld [vmem:[%s2 + $0x20] sm:$0xff]
        %v606 = vld [vmem:[%s2 + $0x28] sm:$0xff]
        %v607 = vld [vmem:[%s2 + $0x30] sm:$0xff]
        %v608 = vld [vmem:[%s2 + $0x38] sm:$0xff]
        %v609 = vld [vmem:[%s2 + $0x40] sm:$0xff]
        %v610 = vld [vmem:[%s2 + $0x48] sm:$0xff]
        %v611 = vld [vmem:[%s2 + $0x50] sm:$0xff]
        %v612 = vld [vmem:[%s2 + $0x58] sm:$0xff]
        %v613 = vld [vmem:[%s2 + $0x60] sm:$0xff]
        %v614 = vld [vmem:[%s2 + $0x68] sm:$0xff]
        %v615 = vld [vmem:[%s2 + $0x70] sm:$0xff]
        %v616 = vld [vmem:[%s2 + $0x78] sm:$0xff]
        %v617 = vld [vmem:[%s2 + $0x80] sm:$0xff]
        %v618 = vld [vmem:[%s2 + $0x88] sm:$0xff]
        %v619 = vld [vmem:[%s2 + $0x90] sm:$0xff]
        %v620 = vld [vmem:[%s2 + $0x98] sm:$0xff]
        %v621 = vld [vmem:[%s2 + $0xa0] sm:$0xff]
        %v622 = vld [vmem:[%s2 + $0xa8] sm:$0xff]
        %v623 = vld [vmem:[%s2 + $0xb0] sm:$0xff]
        %v624 = vld [vmem:[%s2 + $0xb8] sm:$0xff]
        %v625 = vld [vmem:[%s2 + $0xc0] sm:$0xff]
        %v626 = vld [vmem:[%s2 + $0xc8] sm:$0xff]
        %v627 = vld [vmem:[%s2 + $0xd0] sm:$0xff]
        %v628 = vld [vmem:[%s2 + $0xd8] sm:$0xff]
        %v629 = vld [vmem:[%s2 + $0xe0] sm:$0xff]
        %v630 = vld [vmem:[%s2 + $0xe8] sm:$0xff]
        %v631 = vld [vmem:[%s2 + $0xf0] sm:$0xff]
        %v632 = vld [vmem:[%s2 + $0xf8] sm:$0xff]
        %633 = vmatpush.msra.mxu0 %v616
        %634 = vmatpush.msra.mxu0 %v615
        %635 = vmatpush.msra.mxu0 %v614
        %636 = vmatpush.msra.mxu0 %v613
        %637 = vmatpush.msra.mxu0 %v612
        %638 = vmatpush.msra.mxu0 %v611
        %639 = vmatpush.msra.mxu0 %v610
        %640 = vmatpush.msra.mxu0 %v609
        %641 = vmatpush.msra.mxu0 %v608
        %642 = vmatpush.msra.mxu0 %v607
        %643 = vmatpush.msra.mxu0 %v606
        %644 = vmatpush.msra.mxu0 %v605
        %645 = vmatpush.msra.mxu0 %v604
        %646 = vmatpush.msra.mxu0 %v603
        %647 = vmatpush.msra.mxu0 %v602
        %648 = vmatpush.msra.mxu0 %v601
        %649 = vmatmul.f32.gmra.mxu0 %v559
        %v650 = vpop.f32.mrf.mxu0
        %v651 = vadd.f32 0.0, %v650
        %652 = vdwg.mxu0
        %653 = vmatpush.msra.mxu0 %v632
        %654 = vmatpush.msra.mxu0 %v631
        %655 = vmatpush.msra.mxu0 %v630
        %656 = vmatpush.msra.mxu0 %v629
        %657 = vmatpush.msra.mxu0 %v628
        %658 = vmatpush.msra.mxu0 %v627
        %659 = vmatpush.msra.mxu0 %v626
        %660 = vmatpush.msra.mxu0 %v625
        %661 = vmatpush.msra.mxu0 %v624
        %662 = vmatpush.msra.mxu0 %v623
        %663 = vmatpush.msra.mxu0 %v622
        %664 = vmatpush.msra.mxu0 %v621
        %665 = vmatpush.msra.mxu0 %v620
        %666 = vmatpush.msra.mxu0 %v619
        %667 = vmatpush.msra.mxu0 %v618
        %668 = vmatpush.msra.mxu0 %v617
        %669 = vmatmul.f32.gmra.mxu0 %v599
        %v670 = vpop.f32.mrf.mxu0
        %v671 = vadd.f32 %v651, %v670
        %672 = vdwg.mxu0
        %v673 = vld [vmem:[%s3] sm:$0xff]
        %v674 = vld [vmem:[%s3 + $0x8] sm:$0xff]
        %v675 = vld [vmem:[%s3 + $0x10] sm:$0xff]
        %v676 = vld [vmem:[%s3 + $0x18] sm:$0xff]
        %v677 = vld [vmem:[%s3 + $0x20] sm:$0xff]
        %v678 = vld [vmem:[%s3 + $0x28] sm:$0xff]
        %v679 = vld [vmem:[%s3 + $0x30] sm:$0xff]
        %v680 = vld [vmem:[%s3 + $0x38] sm:$0xff]
        %v681 = vld [vmem:[%s3 + $0x40] sm:$0xff]
        %v682 = vld [vmem:[%s3 + $0x48] sm:$0xff]
        %v683 = vld [vmem:[%s3 + $0x50] sm:$0xff]
        %v684 = vld [vmem:[%s3 + $0x58] sm:$0xff]
        %v685 = vld [vmem:[%s3 + $0x60] sm:$0xff]
        %v686 = vld [vmem:[%s3 + $0x68] sm:$0xff]
        %v687 = vld [vmem:[%s3 + $0x70] sm:$0xff]
        %v688 = vld [vmem:[%s3 + $0x78] sm:$0xff]
        %v689 = vld [vmem:[%s3 + $0x80] sm:$0xff]
        %v690 = vld [vmem:[%s3 + $0x88] sm:$0xff]
        %v691 = vld [vmem:[%s3 + $0x90] sm:$0xff]
        %v692 = vld [vmem:[%s3 + $0x98] sm:$0xff]
        %v693 = vld [vmem:[%s3 + $0xa0] sm:$0xff]
        %v694 = vld [vmem:[%s3 + $0xa8] sm:$0xff]
        %v695 = vld [vmem:[%s3 + $0xb0] sm:$0xff]
        %v696 = vld [vmem:[%s3 + $0xb8] sm:$0xff]
        %v697 = vld [vmem:[%s3 + $0xc0] sm:$0xff]
        %v698 = vld [vmem:[%s3 + $0xc8] sm:$0xff]
        %v699 = vld [vmem:[%s3 + $0xd0] sm:$0xff]
        %v700 = vld [vmem:[%s3 + $0xd8] sm:$0xff]
        %v701 = vld [vmem:[%s3 + $0xe0] sm:$0xff]
        %v702 = vld [vmem:[%s3 + $0xe8] sm:$0xff]
        %v703 = vld [vmem:[%s3 + $0xf0] sm:$0xff]
        %v704 = vld [vmem:[%s3 + $0xf8] sm:$0xff]
        %705 = vmatpush.msra.mxu0 %v688
        %706 = vmatpush.msra.mxu0 %v687
        %707 = vmatpush.msra.mxu0 %v686
        %708 = vmatpush.msra.mxu0 %v685
        %709 = vmatpush.msra.mxu0 %v684
        %710 = vmatpush.msra.mxu0 %v683
        %711 = vmatpush.msra.mxu0 %v682
        %712 = vmatpush.msra.mxu0 %v681
        %713 = vmatpush.msra.mxu0 %v680
        %714 = vmatpush.msra.mxu0 %v679
        %715 = vmatpush.msra.mxu0 %v678
        %716 = vmatpush.msra.mxu0 %v677
        %717 = vmatpush.msra.mxu0 %v676
        %718 = vmatpush.msra.mxu0 %v675
        %719 = vmatpush.msra.mxu0 %v674
        %720 = vmatpush.msra.mxu0 %v673
        %721 = vmatmul.f32.gmra.mxu0 %v559
        %v722 = vpop.f32.mrf.mxu0
        %v723 = vadd.f32 0.0, %v722
        %724 = vdwg.mxu0
        %725 = vmatpush.msra.mxu0 %v704
        %726 = vmatpush.msra.mxu0 %v703
        %727 = vmatpush.msra.mxu0 %v702
        %728 = vmatpush.msra.mxu0 %v701
        %729 = vmatpush.msra.mxu0 %v700
        %730 = vmatpush.msra.mxu0 %v699
        %731 = vmatpush.msra.mxu0 %v698
        %732 = vmatpush.msra.mxu0 %v697
        %733 = vmatpush.msra.mxu0 %v696
        %734 = vmatpush.msra.mxu0 %v695
        %735 = vmatpush.msra.mxu0 %v694
        %736 = vmatpush.msra.mxu0 %v693
        %737 = vmatpush.msra.mxu0 %v692
        %738 = vmatpush.msra.mxu0 %v691
        %739 = vmatpush.msra.mxu0 %v690
        %740 = vmatpush.msra.mxu0 %v689
        %741 = vmatmul.f32.gmra.mxu0 %v599
        %v742 = vpop.f32.mrf.mxu0
        %v743 = vadd.f32 %v723, %v742
        %744 = vdwg.mxu0
        %v745 = vld [vmem:[%s4] sm:$0xff]
        %v746 = vld [vmem:[%s4 + $0x8] sm:$0xff]
        %v747 = vld [vmem:[%s4 + $0x10] sm:$0xff]
        %v748 = vld [vmem:[%s4 + $0x18] sm:$0xff]
        %v749 = vld [vmem:[%s4 + $0x20] sm:$0xff]
        %v750 = vld [vmem:[%s4 + $0x28] sm:$0xff]
        %v751 = vld [vmem:[%s4 + $0x30] sm:$0xff]
        %v752 = vld [vmem:[%s4 + $0x38] sm:$0xff]
        %v753 = vld [vmem:[%s4 + $0x40] sm:$0xff]
        %v754 = vld [vmem:[%s4 + $0x48] sm:$0xff]
        %v755 = vld [vmem:[%s4 + $0x50] sm:$0xff]
        %v756 = vld [vmem:[%s4 + $0x58] sm:$0xff]
        %v757 = vld [vmem:[%s4 + $0x60] sm:$0xff]
        %v758 = vld [vmem:[%s4 + $0x68] sm:$0xff]
        %v759 = vld [vmem:[%s4 + $0x70] sm:$0xff]
        %v760 = vld [vmem:[%s4 + $0x78] sm:$0xff]
        %v761 = vld [vmem:[%s4 + $0x80] sm:$0xff]
        %v762 = vld [vmem:[%s4 + $0x88] sm:$0xff]
        %v763 = vld [vmem:[%s4 + $0x90] sm:$0xff]
        %v764 = vld [vmem:[%s4 + $0x98] sm:$0xff]
        %v765 = vld [vmem:[%s4 + $0xa0] sm:$0xff]
        %v766 = vld [vmem:[%s4 + $0xa8] sm:$0xff]
        %v767 = vld [vmem:[%s4 + $0xb0] sm:$0xff]
        %v768 = vld [vmem:[%s4 + $0xb8] sm:$0xff]
        %v769 = vld [vmem:[%s4 + $0xc0] sm:$0xff]
        %v770 = vld [vmem:[%s4 + $0xc8] sm:$0xff]
        %v771 = vld [vmem:[%s4 + $0xd0] sm:$0xff]
        %v772 = vld [vmem:[%s4 + $0xd8] sm:$0xff]
        %v773 = vld [vmem:[%s4 + $0xe0] sm:$0xff]
        %v774 = vld [vmem:[%s4 + $0xe8] sm:$0xff]
        %v775 = vld [vmem:[%s4 + $0xf0] sm:$0xff]
        %v776 = vld [vmem:[%s4 + $0xf8] sm:$0xff]
        %777 = vmatpush.msra.mxu0 %v760
        %778 = vmatpush.msra.mxu0 %v759
        %779 = vmatpush.msra.mxu0 %v758
        %780 = vmatpush.msra.mxu0 %v757
        %781 = vmatpush.msra.mxu0 %v756
        %782 = vmatpush.msra.mxu0 %v755
        %783 = vmatpush.msra.mxu0 %v754
        %784 = vmatpush.msra.mxu0 %v753
        %785 = vmatpush.msra.mxu0 %v752
        %786 = vmatpush.msra.mxu0 %v751
        %787 = vmatpush.msra.mxu0 %v750
        %788 = vmatpush.msra.mxu0 %v749
        %789 = vmatpush.msra.mxu0 %v748
        %790 = vmatpush.msra.mxu0 %v747
        %791 = vmatpush.msra.mxu0 %v746
        %792 = vmatpush.msra.mxu0 %v745
        %793 = vmatmul.f32.gmra.mxu0 %v559
        %v794 = vpop.f32.mrf.mxu0
        %v795 = vadd.f32 0.0, %v794
        %796 = vdwg.mxu0
        %797 = vmatpush.msra.mxu0 %v776
        %798 = vmatpush.msra.mxu0 %v775
        %799 = vmatpush.msra.mxu0 %v774
        %800 = vmatpush.msra.mxu0 %v773
        %801 = vmatpush.msra.mxu0 %v772
        %802 = vmatpush.msra.mxu0 %v771
        %803 = vmatpush.msra.mxu0 %v770
        %804 = vmatpush.msra.mxu0 %v769
        %805 = vmatpush.msra.mxu0 %v768
        %806 = vmatpush.msra.mxu0 %v767
        %807 = vmatpush.msra.mxu0 %v766
        %808 = vmatpush.msra.mxu0 %v765
        %809 = vmatpush.msra.mxu0 %v764
        %810 = vmatpush.msra.mxu0 %v763
        %811 = vmatpush.msra.mxu0 %v762
        %812 = vmatpush.msra.mxu0 %v761
        %813 = vmatmul.f32.gmra.mxu0 %v599
        %v814 = vpop.f32.mrf.mxu0
        %v815 = vadd.f32 %v795, %v814
        %816 = vdwg.mxu0
        %v817 = vld [vmem:[%s5] sm:$0xff]
        %v818 = vld [vmem:[%s5 + $0x8] sm:$0xff]
        %v819 = vld [vmem:[%s5 + $0x10] sm:$0xff]
        %v820 = vld [vmem:[%s5 + $0x18] sm:$0xff]
        %v821 = vld [vmem:[%s5 + $0x20] sm:$0xff]
        %v822 = vld [vmem:[%s5 + $0x28] sm:$0xff]
        %v823 = vld [vmem:[%s5 + $0x30] sm:$0xff]
        %v824 = vld [vmem:[%s5 + $0x38] sm:$0xff]
        %v825 = vld [vmem:[%s5 + $0x40] sm:$0xff]
        %v826 = vld [vmem:[%s5 + $0x48] sm:$0xff]
        %v827 = vld [vmem:[%s5 + $0x50] sm:$0xff]
        %v828 = vld [vmem:[%s5 + $0x58] sm:$0xff]
        %v829 = vld [vmem:[%s5 + $0x60] sm:$0xff]
        %v830 = vld [vmem:[%s5 + $0x68] sm:$0xff]
        %v831 = vld [vmem:[%s5 + $0x70] sm:$0xff]
        %v832 = vld [vmem:[%s5 + $0x78] sm:$0xff]
        %v833 = vld [vmem:[%s5 + $0x80] sm:$0xff]
        %v834 = vld [vmem:[%s5 + $0x88] sm:$0xff]
        %v835 = vld [vmem:[%s5 + $0x90] sm:$0xff]
        %v836 = vld [vmem:[%s5 + $0x98] sm:$0xff]
        %v837 = vld [vmem:[%s5 + $0xa0] sm:$0xff]
        %v838 = vld [vmem:[%s5 + $0xa8] sm:$0xff]
        %v839 = vld [vmem:[%s5 + $0xb0] sm:$0xff]
        %v840 = vld [vmem:[%s5 + $0xb8] sm:$0xff]
        %v841 = vld [vmem:[%s5 + $0xc0] sm:$0xff]
        %v842 = vld [vmem:[%s5 + $0xc8] sm:$0xff]
        %v843 = vld [vmem:[%s5 + $0xd0] sm:$0xff]
        %v844 = vld [vmem:[%s5 + $0xd8] sm:$0xff]
        %v845 = vld [vmem:[%s5 + $0xe0] sm:$0xff]
        %v846 = vld [vmem:[%s5 + $0xe8] sm:$0xff]
        %v847 = vld [vmem:[%s5 + $0xf0] sm:$0xff]
        %v848 = vld [vmem:[%s5 + $0xf8] sm:$0xff]
        %849 = vmatpush.msra.mxu0 %v832
        %850 = vmatpush.msra.mxu0 %v831
        %851 = vmatpush.msra.mxu0 %v830
        %852 = vmatpush.msra.mxu0 %v829
        %853 = vmatpush.msra.mxu0 %v828
        %854 = vmatpush.msra.mxu0 %v827
        %855 = vmatpush.msra.mxu0 %v826
        %856 = vmatpush.msra.mxu0 %v825
        %857 = vmatpush.msra.mxu0 %v824
        %858 = vmatpush.msra.mxu0 %v823
        %859 = vmatpush.msra.mxu0 %v822
        %860 = vmatpush.msra.mxu0 %v821
        %861 = vmatpush.msra.mxu0 %v820
        %862 = vmatpush.msra.mxu0 %v819
        %863 = vmatpush.msra.mxu0 %v818
        %864 = vmatpush.msra.mxu0 %v817
        %865 = vmatmul.f32.gmra.mxu0 %v559
        %v866 = vpop.f32.mrf.mxu0
        %v867 = vadd.f32 0.0, %v866
        %868 = vdwg.mxu0
        %869 = vmatpush.msra.mxu0 %v848
        %870 = vmatpush.msra.mxu0 %v847
        %871 = vmatpush.msra.mxu0 %v846
        %872 = vmatpush.msra.mxu0 %v845
        %873 = vmatpush.msra.mxu0 %v844
        %874 = vmatpush.msra.mxu0 %v843
        %875 = vmatpush.msra.mxu0 %v842
        %876 = vmatpush.msra.mxu0 %v841
        %877 = vmatpush.msra.mxu0 %v840
        %878 = vmatpush.msra.mxu0 %v839
        %879 = vmatpush.msra.mxu0 %v838
        %880 = vmatpush.msra.mxu0 %v837
        %881 = vmatpush.msra.mxu0 %v836
        %882 = vmatpush.msra.mxu0 %v835
        %883 = vmatpush.msra.mxu0 %v834
        %884 = vmatpush.msra.mxu0 %v833
        %885 = vmatmul.f32.gmra.mxu0 %v599
        %v886 = vpop.f32.mrf.mxu0
        %v887 = vadd.f32 %v867, %v886
        %888 = vdwg.mxu0
        %v889 = vmax.f32 %v671, %v743
        %v890 = vmax.f32 %v815, %v887
        %v891 = vmax.f32 %v889, %v890
        %v892 = vld [vmem:[%s6] sm:$0xff]
        %vm893 = vcmask 31744
        %v895 = vsel %vm893, %v892, 0
        %vm897 = vcmask 1043456
        %v899 = vsel %vm897, %v891, 0
        %901 = vmatpush.msra.mxu0 0.0
        %902 = vmatpush.msra.mxu0 0.0
        %903 = vmatpush.msra.mxu0 0.0
        %904 = vmatpush.msra.mxu0 0.0
        %905 = vmatpush.msra.mxu0 0.0
        %906 = vmatpush.msra.mxu0 0.0
        %907 = vmatpush.msra.mxu0 0.0
        %908 = vmatpush.msra.mxu0 0.0
        %909 = vmatpush.msra.mxu0 0.0
        %910 = vmatpush.msra.mxu0 0.0
        %911 = vmatpush.msra.mxu0 0.0
        %912 = vmatpush.msra.mxu0 0.0
        %913 = vmatpush.msra.mxu0 0.0
        %914 = vmatpush.msra.mxu0 0.0
        %915 = vmatpush.msra.mxu0 0.0
        %916 = vmatpush.msra.mxu0 %v899
        %917 = vmatmul.f32.gmra.mxu0 %v895
        %v918 = vpop.f32.mrf.mxu0
        %v919 = vadd.f32 0.0, %v918
        %920 = vdwg.mxu0
        %v921 = vsub.f32 0.0, %v919
        %v922 = vmul.f32 %v921, 1.442695
        %v923 = vpow.pop %v922
        %v924 = vadd.f32 %v923, 1.0
        %v925 = vrcp.pop %v924
        %v926 = vmul.f32 %v924, %v925
        %v927 = vsub.f32 1.0, %v926
        %v928 = vmul.f32 %v925, %v927
        %v929 = vadd.f32 %v925, %v928
        %vm930 = vweird.f32 %v924
        %vm931 = vweird.f32 %v925
        %vm932 = vmor %vm930, %vm931
        %v933 = vsel %vm932, %v925, %v929
        %v934 = vand.u32 2147483647, %v924
        %vm935 = vcmp.eq.f32.partialorder %v934, 8.507059e+37
        %v936 = vand.u32 %v924, 2147483648
        %v937 = vor.u32 1.1754944e-38, %v936
        %v938 = vsel %vm935, %v937, %v933
        %v939 = vmul.f32 1.0, %v938
        %v940 = vmul.f32 %v919, %v939
        %vm941 = vcmask 523264
        %942 = vst.msk [vmem:[%s437] sm:$0xff] %vm941, %v940
        %v943 = vld [vmem:[%s7] sm:$0xff]
        %v944 = vld [vmem:[%s7 + $0x8] sm:$0xff]
        %v945 = vld [vmem:[%s7 + $0x10] sm:$0xff]
        %v946 = vld [vmem:[%s7 + $0x18] sm:$0xff]
        %v947 = vld [vmem:[%s7 + $0x20] sm:$0xff]
        %v948 = vld [vmem:[%s7 + $0x28] sm:$0xff]
        %v949 = vld [vmem:[%s7 + $0x30] sm:$0xff]
        %v950 = vld [vmem:[%s7 + $0x38] sm:$0xff]
        %v951 = vsel %vm941, %v891, 0
        %953 = vmatpush.msra.mxu0 0.0
        %954 = vmatpush.msra.mxu0 0.0
        %955 = vmatpush.msra.mxu0 0.0
        %956 = vmatpush.msra.mxu0 0.0
        %957 = vmatpush.msra.mxu0 0.0
        %958 = vmatpush.msra.mxu0 0.0
        %959 = vmatpush.msra.mxu0 0.0
        %960 = vmatpush.msra.mxu0 0.0
        %961 = vmatpush.msra.mxu0 %v950
        %962 = vmatpush.msra.mxu0 %v949
        %963 = vmatpush.msra.mxu0 %v948
        %964 = vmatpush.msra.mxu0 %v947
        %965 = vmatpush.msra.mxu0 %v946
        %966 = vmatpush.msra.mxu0 %v945
        %967 = vmatpush.msra.mxu0 %v944
        %968 = vmatpush.msra.mxu0 %v943
        %969 = vmatmul.f32.gmra.mxu0 %v951
        %v970 = vpop.f32.mrf.mxu0
        %v971 = vadd.f32 0.0, %v970
        %972 = vdwg.mxu0
        %v973 = vld [vmem:[%s8] sm:$0xff]
        %v974 = vld [vmem:[%s8 + $0x8] sm:$0xff]
        %v975 = vld [vmem:[%s8 + $0x10] sm:$0xff]
        %v976 = vld [vmem:[%s8 + $0x18] sm:$0xff]
        %v977 = vld [vmem:[%s8 + $0x20] sm:$0xff]
        %v978 = vld [vmem:[%s8 + $0x28] sm:$0xff]
        %v979 = vld [vmem:[%s8 + $0x30] sm:$0xff]
        %v980 = vld [vmem:[%s8 + $0x38] sm:$0xff]
        %981 = vmatpush.msra.mxu0 0.0
        %982 = vmatpush.msra.mxu0 0.0
        %983 = vmatpush.msra.mxu0 0.0
        %984 = vmatpush.msra.mxu0 0.0
        %985 = vmatpush.msra.mxu0 0.0
        %986 = vmatpush.msra.mxu0 0.0
        %987 = vmatpush.msra.mxu0 0.0
        %988 = vmatpush.msra.mxu0 0.0
        %989 = vmatpush.msra.mxu0 %v980
        %990 = vmatpush.msra.mxu0 %v979
        %991 = vmatpush.msra.mxu0 %v978
        %992 = vmatpush.msra.mxu0 %v977
        %993 = vmatpush.msra.mxu0 %v976
        %994 = vmatpush.msra.mxu0 %v975
        %995 = vmatpush.msra.mxu0 %v974
        %996 = vmatpush.msra.mxu0 %v973
        %997 = vmatmul.f32.gmra.mxu0 %v951
        %v998 = vpop.f32.mrf.mxu0
        %v999 = vadd.f32 0.0, %v998
        %1000 = vdwg.mxu0
        %v1001 = vld [vmem:[%s9] sm:$0xff]
        %v1002 = vld [vmem:[%s9 + $0x8] sm:$0xff]
        %v1003 = vld [vmem:[%s9 + $0x10] sm:$0xff]
        %v1004 = vld [vmem:[%s9 + $0x18] sm:$0xff]
        %v1005 = vld [vmem:[%s9 + $0x20] sm:$0xff]
        %v1006 = vld [vmem:[%s9 + $0x28] sm:$0xff]
        %v1007 = vld [vmem:[%s9 + $0x30] sm:$0xff]
        %v1008 = vld [vmem:[%s9 + $0x38] sm:$0xff]
        %1009 = vmatpush.msra.mxu0 0.0
        %1010 = vmatpush.msra.mxu0 0.0
        %1011 = vmatpush.msra.mxu0 0.0
        %1012 = vmatpush.msra.mxu0 0.0
        %1013 = vmatpush.msra.mxu0 0.0
        %1014 = vmatpush.msra.mxu0 0.0
        %1015 = vmatpush.msra.mxu0 0.0
        %1016 = vmatpush.msra.mxu0 0.0
        %1017 = vmatpush.msra.mxu0 %v1008
        %1018 = vmatpush.msra.mxu0 %v1007
        %1019 = vmatpush.msra.mxu0 %v1006
        %1020 = vmatpush.msra.mxu0 %v1005
        %1021 = vmatpush.msra.mxu0 %v1004
        %1022 = vmatpush.msra.mxu0 %v1003
        %1023 = vmatpush.msra.mxu0 %v1002
        %1024 = vmatpush.msra.mxu0 %v1001
        %1025 = vmatmul.f32.gmra.mxu0 %v951
        %v1026 = vpop.f32.mrf.mxu0
        %v1027 = vadd.f32 0.0, %v1026
        %1028 = vdwg.mxu0
        %v1029 = vld [vmem:[%s10] sm:$0xff]
        %v1030 = vld [vmem:[%s10 + $0x8] sm:$0xff]
        %v1031 = vld [vmem:[%s10 + $0x10] sm:$0xff]
        %v1032 = vld [vmem:[%s10 + $0x18] sm:$0xff]
        %v1033 = vld [vmem:[%s10 + $0x20] sm:$0xff]
        %v1034 = vld [vmem:[%s10 + $0x28] sm:$0xff]
        %v1035 = vld [vmem:[%s10 + $0x30] sm:$0xff]
        %v1036 = vld [vmem:[%s10 + $0x38] sm:$0xff]
        %1037 = vmatpush.msra.mxu0 0.0
        %1038 = vmatpush.msra.mxu0 0.0
        %1039 = vmatpush.msra.mxu0 0.0
        %1040 = vmatpush.msra.mxu0 0.0
        %1041 = vmatpush.msra.mxu0 0.0
        %1042 = vmatpush.msra.mxu0 0.0
        %1043 = vmatpush.msra.mxu0 0.0
        %1044 = vmatpush.msra.mxu0 0.0
        %1045 = vmatpush.msra.mxu0 %v1036
        %1046 = vmatpush.msra.mxu0 %v1035
        %1047 = vmatpush.msra.mxu0 %v1034
        %1048 = vmatpush.msra.mxu0 %v1033
        %1049 = vmatpush.msra.mxu0 %v1032
        %1050 = vmatpush.msra.mxu0 %v1031
        %1051 = vmatpush.msra.mxu0 %v1030
        %1052 = vmatpush.msra.mxu0 %v1029
        %1053 = vmatmul.f32.gmra.mxu0 %v951
        %v1054 = vpop.f32.mrf.mxu0
        %v1055 = vadd.f32 0.0, %v1054
        %1056 = vdwg.mxu0
        %v1057 = vmax.f32 %v971, %v999
        %v1058 = vmax.f32 %v1027, %v1055
        %v1059 = vmax.f32 %v1057, %v1058
        %v1060 = vld [vmem:[%s11] sm:$0xff]
        %v1061 = vld [vmem:[%s11 + $0x8] sm:$0xff]
        %v1063 = vsel %vm893, %v1060, 0
        %v1066 = vsel %vm893, %v1061, 0
        %v1069 = vsel %vm897, %v1059, 0
        %1071 = vmatpush.msra.mxu0 0.0
        %1072 = vmatpush.msra.mxu0 0.0
        %1073 = vmatpush.msra.mxu0 0.0
        %1074 = vmatpush.msra.mxu0 0.0
        %1075 = vmatpush.msra.mxu0 0.0
        %1076 = vmatpush.msra.mxu0 0.0
        %1077 = vmatpush.msra.mxu0 0.0
        %1078 = vmatpush.msra.mxu0 0.0
        %1079 = vmatpush.msra.mxu0 0.0
        %1080 = vmatpush.msra.mxu0 0.0
        %1081 = vmatpush.msra.mxu0 0.0
        %1082 = vmatpush.msra.mxu0 0.0
        %1083 = vmatpush.msra.mxu0 0.0
        %1084 = vmatpush.msra.mxu0 0.0
        %1085 = vmatpush.msra.mxu0 0.0
        %1086 = vmatpush.msra.mxu0 %v1069
        %1087 = vmatmul.f32.gmra.mxu0 %v1063
        %v1088 = vpop.f32.mrf.mxu0
        %v1089 = vadd.f32 0.0, %v1088
        %1090 = vmatmul.f32.gmra.mxu0 %v1066
        %v1091 = vpop.f32.mrf.mxu0
        %v1092 = vadd.f32 0.0, %v1091
        %1093 = vdwg.mxu0
        %v1094 = vsub.f32 0.0, %v1089
        %v1095 = vsub.f32 0.0, %v1092
        %v1096 = vmul.f32 %v1094, 1.442695
        %v1097 = vpow.pop %v1096
        %v1098 = vmul.f32 %v1095, 1.442695
        %v1099 = vpow.pop %v1098
        %v1100 = vadd.f32 %v1097, 1.0
        %v1101 = vadd.f32 %v1099, 1.0
        %v1102 = vrcp.pop %v1100
        %v1103 = vmul.f32 %v1100, %v1102
        %v1104 = vsub.f32 1.0, %v1103
        %v1105 = vmul.f32 %v1102, %v1104
        %v1106 = vadd.f32 %v1102, %v1105
        %vm1107 = vweird.f32 %v1100
        %vm1108 = vweird.f32 %v1102
        %vm1109 = vmor %vm1107, %vm1108
        %v1110 = vsel %vm1109, %v1102, %v1106
        %v1111 = vand.u32 2147483647, %v1100
        %vm1112 = vcmp.eq.f32.partialorder %v1111, 8.507059e+37
        %v1113 = vand.u32 %v1100, 2147483648
        %v1114 = vor.u32 1.1754944e-38, %v1113
        %v1115 = vsel %vm1112, %v1114, %v1110
        %v1116 = vmul.f32 1.0, %v1115
        %v1117 = vrcp.pop %v1101
        %v1118 = vmul.f32 %v1101, %v1117
        %v1119 = vsub.f32 1.0, %v1118
        %v1120 = vmul.f32 %v1117, %v1119
        %v1121 = vadd.f32 %v1117, %v1120
        %vm1122 = vweird.f32 %v1101
        %vm1123 = vweird.f32 %v1117
        %vm1124 = vmor %vm1122, %vm1123
        %v1125 = vsel %vm1124, %v1117, %v1121
        %v1126 = vand.u32 2147483647, %v1101
        %vm1127 = vcmp.eq.f32.partialorder %v1126, 8.507059e+37
        %v1128 = vand.u32 %v1101, 2147483648
        %v1129 = vor.u32 1.1754944e-38, %v1128
        %v1130 = vsel %vm1127, %v1129, %v1125
        %v1131 = vmul.f32 1.0, %v1130
        %v1132 = vmul.f32 %v1089, %v1116
        %v1133 = vmul.f32 %v1092, %v1131
        %vm1134 = vcmask 130048
        %1135 = vst.msk [vmem:[%s444] sm:$0xff] %vm1134, %v1132
        %1136 = vst.msk [vmem:[%s444 + $0x8] sm:$0xff] %vm1134, %v1133
        %s1137 = sand.u32 %s296, 1
        %s1138 = scalar_lea.sflag [#allocation3], %s1137
        %s1139 = sand.u32 %s296, 1
        %s1140 = smul.addr %s1139, 8
        %s1141 = scalar_lea.vmem [#allocation2], %s1140
        %s1142 = sand.u32 %s322, 1
        %s1143 = scalar_lea.sflag [#allocation5], %s1142
        %s1144 = sand.u32 %s322, 1
        %s1145 = smul.addr %s1144, 16
        %s1146 = scalar_lea.vmem [#allocation4], %s1145
        // Predicated region
        $region69: #{tpu_custom_call.1} parent=67 // pred_check
          %p1147 = pneg %p306
        $region70: #{tpu_custom_call.1} parent=67 // pred_check_branch
          %1149 = sbr.rel (%p1147) target = $region72
        $region71: #{tpu_custom_call.1} parent=67 // pred_region
          %1151 = vsyncadd %s1138, 0
          %s1152 = smul.addr %s31, 8
          %s1153 = scalar_lea.hbm %s12, %s1152
          %s1155 = sshll.u32 %s1141, 4
          %s1156 = int_to_ptr.vmem [resolvable:$true] %s1155
          %s1157 = sshll.u32 %s1153, 4
          %s1158 = int_to_ptr.hbm [resolvable:$true] %s1157
          %1160 = dma.vmem_to_hbm [thread:$0]  %s1156, 128, %s1158, %s1138
        $region72: #{tpu_custom_call.1} parent=67 // pred_fallthru
          _
        // Predicated region
        $region73: #{tpu_custom_call.1} parent=67 // pred_check
          %p1161 = pneg %p332
        $region74: #{tpu_custom_call.1} parent=67 // pred_check_branch
          %1163 = sbr.rel (%p1161) target = $region76
        $region75: #{tpu_custom_call.1} parent=67 // pred_region
          %1165 = vsyncadd %s1143, 0
          %s1166 = smul.addr %s31, 2
          %s1167 = smul.addr %s1166, 8
          %s1168 = scalar_lea.hbm %s13, %s1167
          %s1169 = sshll.u32 %s1146, 4
          %s1170 = int_to_ptr.vmem [resolvable:$true] %s1169
          %s1171 = sshll.u32 %s1168, 4
          %s1172 = int_to_ptr.hbm [resolvable:$true] %s1171
          %1177 = dma.vmem_to_hbm [thread:$0]  %s1170, 256, %s1172, %s1143, 128, 128, 8
        $region76: #{tpu_custom_call.1} parent=67 // pred_fallthru
          _
      $region68: #{tpu_custom_call.1} parent=5 // pred_fallthru
        _
      %p1178 = scmp.le.s32.totalorder 2, %s26
      // Predicated region
      $region77: #{tpu_custom_call.1} parent=5 // pred_check
        %p1179 = pneg %p1178
      $region78: #{tpu_custom_call.1} parent=5 // pred_check_branch
        %1181 = sbr.rel (%p1179) target = $region80
      $region79: #{tpu_custom_call.1} parent=5 // pred_region
        %s1182 = ssub.s32 %s26, 2
        // Predicated region
        $region81: #{tpu_custom_call.1} parent=79 // pred_check
          %p1183 = pneg %p312
        $region82: #{tpu_custom_call.1} parent=79 // pred_check_branch
          %1185 = sbr.rel (%p1183) target = $region84
        $region83: #{tpu_custom_call.1} parent=79 // pred_region
          %s1186 = sand.u32 %s297, 1
          %s1187 = scalar_lea.sflag [#allocation3], %s1186
          %s1188 = sand.u32 %s297, 1
          %s1189 = smul.addr %s1188, 8
          %s1190 = scalar_lea.vmem [#allocation2], %s1189
          %1192 = dma.done %s1187, 128
        $region84: #{tpu_custom_call.1} parent=79 // pred_fallthru
          _
        // Predicated region
        $region85: #{tpu_custom_call.1} parent=79 // pred_check
          %p1193 = pneg %p338
        $region86: #{tpu_custom_call.1} parent=79 // pred_check_branch
          %1195 = sbr.rel (%p1193) target = $region88
        $region87: #{tpu_custom_call.1} parent=79 // pred_region
          %s1196 = sand.u32 %s323, 1
          %s1197 = scalar_lea.sflag [#allocation5], %s1196
          %s1198 = sand.u32 %s323, 1
          %s1199 = smul.addr %s1198, 16
          %s1200 = scalar_lea.vmem [#allocation4], %s1199
          %1202 = dma.done %s1197, 256
        $region88: #{tpu_custom_call.1} parent=79 // pred_fallthru
          _
      $region80: #{tpu_custom_call.1} parent=5 // pred_fallthru
        _
    $region6: #{tpu_custom_call.1} parent=1 // loop_footer
      %s30 = sadd.s32 1, %s26
    $region7: #{tpu_custom_call.1} parent=1 // loop_footer_branch
      %25 = sbr.rel target = $region3
    $region8: #{tpu_custom_call.1} parent=1 // loop_exit
      _
    %1203 = vsyncpa [#allocation3], 1
    %s1204 = scalar_lea.sflag [#allocation3], 1
    %1205 = vsyncpa %s1204, 1
    %1206 = vsyncpa [#allocation5], 1
    %s1207 = scalar_lea.sflag [#allocation5], 1
    %1208 = vsyncpa %s1207, 1

</llo_original>
